<compile_context>
chip_gen: v5e
topology: v5e:2x2
jax: 0.10.0
libtpu: 0.0.40
codegen_flags: <defaults>
</compile_context>

<pallas_src>
import functools
import math

import jax
import jax.numpy as jnp
from jax.experimental import pallas as pl
from jax.experimental.pallas import tpu as pltpu


def _round_up(x, m):
    return (x + m - 1) // m * m


def _shift_down(arr, k, fill):
    """result[:, t, :] = arr[:, t - k, :]; rows t < k are filled with `fill`."""
    tp, L, C = arr.shape
    pad = jnp.full((tp, k, C), fill, arr.dtype)
    return jnp.concatenate([pad, arr[:, :L - k, :]], axis=1)


def patient_pool_kernel(x_ref, dem_ref, w1_ref, b1_ref, w2_ref, b2_ref,
                        gam_ref, bet_ref, out_ref, act_ref, idx_ref,
                        *, include_timestep, eps=1e-5):
    tp, L, C = x_ref.shape
    dem_out = w2_ref.shape[1]
    d_pad = out_ref.shape[-1]
    d_valid = 3 * C + dem_out + (2 if include_timestep else 0)

    x = x_ref[...]                                               # (tp, L, C) f32
    t_iota = jax.lax.broadcasted_iota(jnp.int32, (tp, L, C), 1)  # timestep index

    # ---- causal (prefix) scans via log-step doubling (Hillis-Steele) ---------
    ps = x                         # prefix sum
    pm = x                         # prefix max over the real (unpadded) elements
    pidx = t_iota                  # index of the earliest prefix max
    k = 1
    while k < L:                   # compile-time unrolled: ceil(log2(L)) steps
        ps = ps + _shift_down(ps, k, 0.0)
        pm_sh = _shift_down(pm, k, -jnp.inf)
        pidx_sh = _shift_down(pidx, k, 0)
        take_earlier = pm_sh >= pm          # ties -> earliest element in window
        pidx = jnp.where(take_earlier, pidx_sh, pidx)
        pm = jnp.maximum(pm, pm_sh)
        k *= 2

    # ---- emulate F.pad(..., (0,0, L-1,0, 0,0)) zero-padding semantics --------
    # Windows at t < L-1 contain (L-1-t) leading zero rows; the zeros sit before
    # the real elements, so they win max-pool ties (first maximal index).
    pad_present = t_iota < (L - 1)
    p_max = jnp.where(pad_present, jnp.maximum(pm, 0.0), pm)
    p_ind = jnp.where(pad_present & (pm <= 0.0), t_iota - (L - 1), pidx)
    p_avg = ps * (1.0 / L)                   # avg_pool1d with count_include_pad
    # TODO(synk): norm_sum_pool1d source not provided; sum / sqrt(L) assumed.
    #             (Any per-row scale is cancelled by the LayerNorm that follows.)
    p_sum = ps * (1.0 / math.sqrt(L))

    act_ref[...] = p_max                      # module's 'activations' (pre-norm)
    idx_ref[...] = p_ind                      # module's 'time_inds' (idx-(L-1))

    # ---- LNNormalizer (assumed: affine LayerNorm over the feature dim) -------
    def layernorm(v, j):
        mean = jnp.mean(v, axis=-1, keepdims=True)
        cen = v - mean
        var = jnp.mean(cen * cen, axis=-1, keepdims=True)
        inv = jax.lax.rsqrt(var + eps)
        return cen * inv * gam_ref[j:j + 1, :] + bet_ref[j:j + 1, :]

    # ---- dem_fc MLP (Dropout(p=0) in eval -> identity, omitted) --------------
    dem = dem_ref[...]                                            # (tp, dem_in)
    h = jnp.maximum(
        jnp.dot(dem, w1_ref[...], preferred_element_type=jnp.float32)
        + b1_ref[...], 0.0)
    dem_emb = jnp.maximum(
        jnp.dot(h, w2_ref[...], preferred_element_type=jnp.float32)
        + b2_ref[...], 0.0)                                       # (tp, dem_out)
    dem_bcast = jnp.broadcast_to(dem_emb[:, None, :], (tp, L, dem_out))

    # ---- lane-dense output via direct slice stores (no concatenate) ----------
    out_ref[:, :, 0:C] = layernorm(p_max, 0)
    out_ref[:, :, C:2 * C] = layernorm(p_avg, 1)
    out_ref[:, :, 2 * C:3 * C] = layernorm(p_sum, 2)
    out_ref[:, :, 3 * C:3 * C + dem_out] = dem_bcast
    if include_timestep:
        t_f = t_iota[:, :, 0:1].astype(jnp.float32)               # (tp, L, 1)
        base = 3 * C + dem_out
        out_ref[:, :, base:base + 1] = jnp.log(t_f + 1.0)
        out_ref[:, :, base + 1:base + 2] = jnp.exp(t_f * (1.0 / 1000.0)) - 1.0
    if d_pad > d_valid:   # zero the lane padding so the slab is deterministic
        out_ref[:, :, d_valid:] = jnp.zeros((tp, L, d_pad - d_valid), jnp.float32)


def patient_pool_encoder_forward(x, dem, w1, b1, w2, b2, gammas, betas,
                                 *, include_timestep=False, tile_np=None):
    """x: (N, L, C) f32 timestep embeddings; dem: (N, dem_in) f32 demographics.

    Returns (out, aux): out is (N, L, 3*C + dem_out [+2]); aux mirrors the
    module's {'time_inds': ..., 'activations': ...} dict with (N, C, L) entries.
    """
    N, L, C = x.shape
    dem_in = dem.shape[1]
    dem_hid = w1.shape[1]
    dem_out = w2.shape[1]
    d_valid = 3 * C + dem_out + (2 if include_timestep else 0)
    d_pad = _round_up(d_valid, 128)          # lane-dense output block

    if tile_np is None:
        # Cover small N in a single grid step; cap the patient tile for VMEM.
        tile_np = min(_round_up(N, 8), 64)
    n_pad = _round_up(N, tile_np)
    if n_pad != N:
        x = jnp.pad(x, ((0, n_pad - N), (0, 0), (0, 0)))
        dem = jnp.pad(dem, ((0, n_pad - N), (0, 0)))
    grid = (n_pad // tile_np,)

    kernel = functools.partial(patient_pool_kernel,
                               include_timestep=include_timestep)

    out_shape = (
        jax.ShapeDtypeStruct((n_pad, L, d_pad), jnp.float32),  # concat features
        jax.ShapeDtypeStruct((n_pad, L, C), jnp.float32),      # raw p_max
        jax.ShapeDtypeStruct((n_pad, L, C), jnp.int32),        # p_max_ind
    )
    in_specs = [
        pl.BlockSpec((tile_np, L, C), lambda i: (i, 0, 0)),       # x
        pl.BlockSpec((tile_np, dem_in), lambda i: (i, 0)),        # dem
        pl.BlockSpec((dem_in, dem_hid), lambda i: (0, 0)),        # W1
        pl.BlockSpec((1, dem_hid), lambda i: (0, 0)),             # b1
        pl.BlockSpec((dem_hid, dem_out), lambda i: (0, 0)),       # W2
        pl.BlockSpec((1, dem_out), lambda i: (0, 0)),             # b2
        pl.BlockSpec((3, C), lambda i: (0, 0)),                   # LN gammas
        pl.BlockSpec((3, C), lambda i: (0, 0)),                   # LN betas
    ]
    out_specs = (
        pl.BlockSpec((tile_np, L, d_pad), lambda i: (i, 0, 0)),
        pl.BlockSpec((tile_np, L, C), lambda i: (i, 0, 0)),
        pl.BlockSpec((tile_np, L, C), lambda i: (i, 0, 0)),
    )

    out, act, idx = pl.pallas_call(
        kernel,
        out_shape=out_shape,
        grid_spec=pltpu.PrefetchScalarGridSpec(
            num_scalar_prefetch=0,
            grid=grid,
            in_specs=in_specs,
            out_specs=out_specs,
        ),
        compiler_params=pltpu.CompilerParams(
            dimension_semantics=("parallel",)),
    )(x, dem, w1, b1.reshape(1, -1), w2, b2.reshape(1, -1), gammas, betas)

    out = out[:N, :, :d_valid]
    # Module stores the aux tensors as (N, C, L) (pre-transpose-back layout).
    act = jnp.transpose(act[:N], (0, 2, 1))
    idx = jnp.transpose(idx[:N], (0, 2, 1))
    # TODO(synk): multiple tables (*timesteps) would re-invoke this kernel per
    #             table and concatenate the three pooled streams of each table.
    return out, {"time_inds": {"table0": idx}, "activations": {"table0": act}}


def reference_forward(x, dem, w1, b1, w2, b2, gammas, betas,
                      *, include_timestep=False, eps=1e-5):
    """Pure-jnp reference (mask-based, different algorithm from the kernel)."""
    N, L, C = x.shape
    mask = jnp.tril(jnp.ones((L, L), dtype=bool))             # [t, s] : s <= t
    xe = x[:, None, :, :]                                     # (N, 1, L, C)
    mmax = jnp.where(mask[None, :, :, None], xe, -jnp.inf)
    pm = jnp.max(mmax, axis=2)                                # (N, L, C)
    pidx = jnp.argmax(mmax, axis=2).astype(jnp.int32)         # first occurrence
    ps = jnp.sum(jnp.where(mask[None, :, :, None], xe, 0.0), axis=2)

    t_idx = jnp.arange(L, dtype=jnp.int32)[None, :, None]
    pad_present = t_idx < (L - 1)
    p_max = jnp.where(pad_present, jnp.maximum(pm, 0.0), pm)
    p_ind = jnp.where(pad_present & (pm <= 0.0), t_idx - (L - 1), pidx)
    p_avg = ps / L
    p_sum = ps / math.sqrt(L)

    def ln(v, g, b):
        mean = jnp.mean(v, axis=-1, keepdims=True)
        cen = v - mean
        var = jnp.mean(cen * cen, axis=-1, keepdims=True)
        return cen * jax.lax.rsqrt(var + eps) * g + b

    feats = [ln(p_max, gammas[0], betas[0]),
             ln(p_avg, gammas[1], betas[1]),
             ln(p_sum, gammas[2], betas[2])]
    h = jnp.maximum(dem @ w1 + b1, 0.0)
    dem_emb = jnp.maximum(h @ w2 + b2, 0.0)
    feats.append(jnp.broadcast_to(dem_emb[:, None, :], (N, L, dem_emb.shape[-1])))
    if include_timestep:
        t_f = jnp.broadcast_to(
            jnp.arange(L, dtype=jnp.float32)[None, :, None], (N, L, 1))
        feats.append(jnp.log(t_f + 1.0))
        feats.append(jnp.exp(t_f / 1000.0) - 1.0)
    out = jnp.concatenate(feats, axis=-1)
    return out, jnp.transpose(p_ind, (0, 2, 1)), jnp.transpose(p_max, (0, 2, 1))


if __name__ == "__main__":
    # Small deterministic configuration.
    N, L, C = 4, 16, 32            # patients, timesteps, input_size
    DEM_IN, DEM_HID, DEM_OUT = 8, 40, 20

    key = jax.random.PRNGKey(0)
    ks = jax.random.split(key, 8)
    x = jax.random.normal(ks[0], (N, L, C), jnp.float32)
    dem = jax.random.normal(ks[1], (N, DEM_IN), jnp.float32)
    w1 = 0.3 * jax.random.normal(ks[2], (DEM_IN, DEM_HID), jnp.float32)
    b1 = 0.1 * jax.random.normal(ks[3], (DEM_HID,), jnp.float32)
    w2 = 0.3 * jax.random.normal(ks[4], (DEM_HID, DEM_OUT), jnp.float32)
    b2 = 0.1 * jax.random.normal(ks[5], (DEM_OUT,), jnp.float32)
    gammas = 1.0 + 0.1 * jax.random.normal(ks[6], (3, C), jnp.float32)
    betas = 0.1 * jax.random.normal(ks[7], (3, C), jnp.float32)

    out, aux = patient_pool_encoder_forward(
        x, dem, w1, b1, w2, b2, gammas, betas, include_timestep=True)
    out = jax.block_until_ready(out)

    ref_out, ref_idx, ref_act = reference_forward(
        x, dem, w1, b1, w2, b2, gammas, betas, include_timestep=True)

    d_out = 3 * C + DEM_OUT + 2
    assert out.shape == (N, L, d_out), out.shape
    assert jnp.allclose(out, ref_out, rtol=2e-4, atol=2e-4), "output mismatch"

    idx = aux["time_inds"]["table0"]
    act = aux["activations"]["table0"]
    assert idx.shape == (N, C, L) and act.shape == (N, C, L)
    assert jnp.array_equal(idx, ref_idx), "time_inds mismatch"
    assert jnp.allclose(act, ref_act, rtol=1e-5, atol=1e-6), "activations mismatch"

    print("KERNEL_OK")
</pallas_src>

<mosaic_0001>
module attributes {stable_mosaic.version = 11 : i64} {
  func.func @patient_pool_kernel(%arg0: i32, %arg1: memref<8x16x32xf32, #tpu.memory_space<vmem>>, %arg2: memref<8x8xf32, #tpu.memory_space<vmem>>, %arg3: memref<8x40xf32, #tpu.memory_space<vmem>>, %arg4: memref<1x40xf32, #tpu.memory_space<vmem>>, %arg5: memref<40x20xf32, #tpu.memory_space<vmem>>, %arg6: memref<1x20xf32, #tpu.memory_space<vmem>>, %arg7: memref<3x32xf32, #tpu.memory_space<vmem>>, %arg8: memref<3x32xf32, #tpu.memory_space<vmem>>, %arg9: memref<8x16x128xf32, #tpu.memory_space<vmem>>, %arg10: memref<8x16x32xf32, #tpu.memory_space<vmem>>, %arg11: memref<8x16x32xi32, #tpu.memory_space<vmem>>) attributes {dimension_semantics = [#tpu.dimension_semantics<parallel>], iteration_bounds = array<i64: 1>, scalar_prefetch = 0 : i64, scratch_operands = 0 : i64, tpu.core_type = #tpu.core_type<tc>, window_params = [{transform_indices = @transform_0, window_bounds = array<i64: 8, 16, 32>}, {transform_indices = @transform_1, window_bounds = array<i64: 8, 8>}, {pipeline_mode = #tpu.pipeline_mode<synchronous>, transform_indices = @transform_2, window_bounds = array<i64: 8, 40>}, {pipeline_mode = #tpu.pipeline_mode<synchronous>, transform_indices = @transform_3, window_bounds = array<i64: 1, 40>}, {pipeline_mode = #tpu.pipeline_mode<synchronous>, transform_indices = @transform_4, window_bounds = array<i64: 40, 20>}, {pipeline_mode = #tpu.pipeline_mode<synchronous>, transform_indices = @transform_5, window_bounds = array<i64: 1, 20>}, {pipeline_mode = #tpu.pipeline_mode<synchronous>, transform_indices = @transform_6, window_bounds = array<i64: 3, 32>}, {pipeline_mode = #tpu.pipeline_mode<synchronous>, transform_indices = @transform_7, window_bounds = array<i64: 3, 32>}, {transform_indices = @transform_8, window_bounds = array<i64: 8, 16, 128>}, {transform_indices = @transform_9, window_bounds = array<i64: 8, 16, 32>}, {transform_indices = @transform_10, window_bounds = array<i64: 8, 16, 32>}]} {
    %c0 = arith.constant 0 : index
    %c0_0 = arith.constant 0 : index
    %c0_1 = arith.constant 0 : index
    %0 = vector.load %arg1[%c0, %c0_0, %c0_1] : memref<8x16x32xf32, #tpu.memory_space<vmem>>, vector<8x16x32xf32>
    %1 = tpu.iota {dimensions = array<i32: 1>} : vector<8x16x32xi32>
    %cst = arith.constant 0.000000e+00 : f32
    %2 = vector.broadcast %cst : f32 to vector<8x1x32xf32>
    %3 = vector.extract_strided_slice %0 {offsets = [0, 0, 0], sizes = [8, 15, 32], strides = [1, 1, 1]} : vector<8x16x32xf32> to vector<8x15x32xf32>
    %4 = tpu.concatenate %2, %3 in 1 : vector<8x1x32xf32>, vector<8x15x32xf32> -> vector<8x16x32xf32>
    %5 = arith.addf %0, %4 : vector<8x16x32xf32>
    %cst_2 = arith.constant 0xFF800000 : f32
    %6 = vector.broadcast %cst_2 : f32 to vector<8x1x32xf32>
    %7 = vector.extract_strided_slice %0 {offsets = [0, 0, 0], sizes = [8, 15, 32], strides = [1, 1, 1]} : vector<8x16x32xf32> to vector<8x15x32xf32>
    %8 = tpu.concatenate %6, %7 in 1 : vector<8x1x32xf32>, vector<8x15x32xf32> -> vector<8x16x32xf32>
    %c0_i32 = arith.constant 0 : i32
    %9 = vector.broadcast %c0_i32 : i32 to vector<8x1x32xi32>
    %10 = vector.extract_strided_slice %1 {offsets = [0, 0, 0], sizes = [8, 15, 32], strides = [1, 1, 1]} : vector<8x16x32xi32> to vector<8x15x32xi32>
    %11 = tpu.concatenate %9, %10 in 1 : vector<8x1x32xi32>, vector<8x15x32xi32> -> vector<8x16x32xi32>
    %12 = arith.cmpf oge, %8, %0 : vector<8x16x32xf32>
    %13 = arith.select %12, %11, %1 : vector<8x16x32xi1>, vector<8x16x32xi32>
    %14 = arith.maximumf %0, %8 : vector<8x16x32xf32>
    %cst_3 = arith.constant 0.000000e+00 : f32
    %15 = vector.broadcast %cst_3 : f32 to vector<8x2x32xf32>
    %16 = vector.extract_strided_slice %5 {offsets = [0, 0, 0], sizes = [8, 14, 32], strides = [1, 1, 1]} : vector<8x16x32xf32> to vector<8x14x32xf32>
    %17 = tpu.concatenate %15, %16 in 1 : vector<8x2x32xf32>, vector<8x14x32xf32> -> vector<8x16x32xf32>
    %18 = arith.addf %5, %17 : vector<8x16x32xf32>
    %cst_4 = arith.constant 0xFF800000 : f32
    %19 = vector.broadcast %cst_4 : f32 to vector<8x2x32xf32>
    %20 = vector.extract_strided_slice %14 {offsets = [0, 0, 0], sizes = [8, 14, 32], strides = [1, 1, 1]} : vector<8x16x32xf32> to vector<8x14x32xf32>
    %21 = tpu.concatenate %19, %20 in 1 : vector<8x2x32xf32>, vector<8x14x32xf32> -> vector<8x16x32xf32>
    %c0_i32_5 = arith.constant 0 : i32
    %22 = vector.broadcast %c0_i32_5 : i32 to vector<8x2x32xi32>
    %23 = vector.extract_strided_slice %13 {offsets = [0, 0, 0], sizes = [8, 14, 32], strides = [1, 1, 1]} : vector<8x16x32xi32> to vector<8x14x32xi32>
    %24 = tpu.concatenate %22, %23 in 1 : vector<8x2x32xi32>, vector<8x14x32xi32> -> vector<8x16x32xi32>
    %25 = arith.cmpf oge, %21, %14 : vector<8x16x32xf32>
    %26 = arith.select %25, %24, %13 : vector<8x16x32xi1>, vector<8x16x32xi32>
    %27 = arith.maximumf %14, %21 : vector<8x16x32xf32>
    %cst_6 = arith.constant 0.000000e+00 : f32
    %28 = vector.broadcast %cst_6 : f32 to vector<8x4x32xf32>
    %29 = vector.extract_strided_slice %18 {offsets = [0, 0, 0], sizes = [8, 12, 32], strides = [1, 1, 1]} : vector<8x16x32xf32> to vector<8x12x32xf32>
    %30 = tpu.concatenate %28, %29 in 1 : vector<8x4x32xf32>, vector<8x12x32xf32> -> vector<8x16x32xf32>
    %31 = arith.addf %18, %30 : vector<8x16x32xf32>
    %cst_7 = arith.constant 0xFF800000 : f32
    %32 = vector.broadcast %cst_7 : f32 to vector<8x4x32xf32>
    %33 = vector.extract_strided_slice %27 {offsets = [0, 0, 0], sizes = [8, 12, 32], strides = [1, 1, 1]} : vector<8x16x32xf32> to vector<8x12x32xf32>
    %34 = tpu.concatenate %32, %33 in 1 : vector<8x4x32xf32>, vector<8x12x32xf32> -> vector<8x16x32xf32>
    %c0_i32_8 = arith.constant 0 : i32
    %35 = vector.broadcast %c0_i32_8 : i32 to vector<8x4x32xi32>
    %36 = vector.extract_strided_slice %26 {offsets = [0, 0, 0], sizes = [8, 12, 32], strides = [1, 1, 1]} : vector<8x16x32xi32> to vector<8x12x32xi32>
    %37 = tpu.concatenate %35, %36 in 1 : vector<8x4x32xi32>, vector<8x12x32xi32> -> vector<8x16x32xi32>
    %38 = arith.cmpf oge, %34, %27 : vector<8x16x32xf32>
    %39 = arith.select %38, %37, %26 : vector<8x16x32xi1>, vector<8x16x32xi32>
    %40 = arith.maximumf %27, %34 : vector<8x16x32xf32>
    %cst_9 = arith.constant 0.000000e+00 : f32
    %41 = vector.broadcast %cst_9 : f32 to vector<8x8x32xf32>
    %42 = vector.extract_strided_slice %31 {offsets = [0, 0, 0], sizes = [8, 8, 32], strides = [1, 1, 1]} : vector<8x16x32xf32> to vector<8x8x32xf32>
    %43 = tpu.concatenate %41, %42 in 1 : vector<8x8x32xf32>, vector<8x8x32xf32> -> vector<8x16x32xf32>
    %44 = arith.addf %31, %43 : vector<8x16x32xf32>
    %cst_10 = arith.constant 0xFF800000 : f32
    %45 = vector.broadcast %cst_10 : f32 to vector<8x8x32xf32>
    %46 = vector.extract_strided_slice %40 {offsets = [0, 0, 0], sizes = [8, 8, 32], strides = [1, 1, 1]} : vector<8x16x32xf32> to vector<8x8x32xf32>
    %47 = tpu.concatenate %45, %46 in 1 : vector<8x8x32xf32>, vector<8x8x32xf32> -> vector<8x16x32xf32>
    %c0_i32_11 = arith.constant 0 : i32
    %48 = vector.broadcast %c0_i32_11 : i32 to vector<8x8x32xi32>
    %49 = vector.extract_strided_slice %39 {offsets = [0, 0, 0], sizes = [8, 8, 32], strides = [1, 1, 1]} : vector<8x16x32xi32> to vector<8x8x32xi32>
    %50 = tpu.concatenate %48, %49 in 1 : vector<8x8x32xi32>, vector<8x8x32xi32> -> vector<8x16x32xi32>
    %51 = arith.cmpf oge, %47, %40 : vector<8x16x32xf32>
    %52 = arith.select %51, %50, %39 : vector<8x16x32xi1>, vector<8x16x32xi32>
    %53 = arith.maximumf %40, %47 : vector<8x16x32xf32>
    %c15_i32 = arith.constant 15 : i32
    %54 = vector.broadcast %c15_i32 : i32 to vector<8x16x32xi32>
    %55 = arith.cmpi slt, %1, %54 : vector<8x16x32xi32>
    %cst_12 = arith.constant 0.000000e+00 : f32
    %56 = vector.broadcast %cst_12 : f32 to vector<8x16x32xf32>
    %57 = arith.maximumf %53, %56 : vector<8x16x32xf32>
    %58 = arith.select %55, %57, %53 : vector<8x16x32xi1>, vector<8x16x32xf32>
    %cst_13 = arith.constant 0.000000e+00 : f32
    %59 = vector.broadcast %cst_13 : f32 to vector<8x16x32xf32>
    %60 = arith.cmpf ole, %53, %59 : vector<8x16x32xf32>
    %61 = arith.andi %55, %60 : vector<8x16x32xi1>
    %c15_i32_14 = arith.constant 15 : i32
    %62 = vector.broadcast %c15_i32_14 : i32 to vector<8x16x32xi32>
    %63 = arith.subi %1, %62 : vector<8x16x32xi32>
    %64 = arith.select %61, %63, %52 : vector<8x16x32xi1>, vector<8x16x32xi32>
    %cst_15 = arith.constant 6.250000e-02 : f32
    %65 = vector.broadcast %cst_15 : f32 to vector<8x16x32xf32>
    %66 = arith.mulf %44, %65 : vector<8x16x32xf32>
    %cst_16 = arith.constant 2.500000e-01 : f32
    %67 = vector.broadcast %cst_16 : f32 to vector<8x16x32xf32>
    %68 = arith.mulf %44, %67 : vector<8x16x32xf32>
    %c0_17 = arith.constant 0 : index
    %c0_18 = arith.constant 0 : index
    %c0_19 = arith.constant 0 : index
    %69 = vector.load %arg10[%c0_17, %c0_18, %c0_19] : memref<8x16x32xf32, #tpu.memory_space<vmem>>, vector<8x16x32xf32>
    tpu.vector_store %arg10[%c0_17, %c0_18, %c0_19], %58 {strides = array<i32>} : memref<8x16x32xf32, #tpu.memory_space<vmem>>, vector<8x16x32xf32>,
    %c0_20 = arith.constant 0 : index
    %c0_21 = arith.constant 0 : index
    %c0_22 = arith.constant 0 : index
    %70 = vector.load %arg11[%c0_20, %c0_21, %c0_22] : memref<8x16x32xi32, #tpu.memory_space<vmem>>, vector<8x16x32xi32>
    tpu.vector_store %arg11[%c0_20, %c0_21, %c0_22], %64 {strides = array<i32>} : memref<8x16x32xi32, #tpu.memory_space<vmem>>, vector<8x16x32xi32>,
    %c0_23 = arith.constant 0 : index
    %c0_24 = arith.constant 0 : index
    %71 = vector.load %arg2[%c0_23, %c0_24] : memref<8x8xf32, #tpu.memory_space<vmem>>, vector<8x8xf32>
    %c0_25 = arith.constant 0 : index
    %c0_26 = arith.constant 0 : index
    %72 = vector.load %arg3[%c0_25, %c0_26] : memref<8x40xf32, #tpu.memory_space<vmem>>, vector<8x40xf32>
    %cst_27 = arith.constant dense<0.000000e+00> : vector<8x40xf32>
    %73 = tpu.matmul %71, %72, %cst_27 {dimension_numbers = #tpu.dot_dimension_numbers<[1], [0], [0], [1], [0, 0, 1, 1], [], []>} : vector<8x8xf32>, vector<8x40xf32>, vector<8x40xf32> -> vector<8x40xf32>
    %c0_28 = arith.constant 0 : index
    %c0_29 = arith.constant 0 : index
    %74 = vector.load %arg4[%c0_28, %c0_29] : memref<1x40xf32, #tpu.memory_space<vmem>>, vector<1x40xf32>
    %75 = vector.broadcast %74 : vector<1x40xf32> to vector<8x40xf32>
    %76 = arith.addf %73, %75 : vector<8x40xf32>
    %cst_30 = arith.constant 0.000000e+00 : f32
    %77 = vector.broadcast %cst_30 : f32 to vector<8x40xf32>
    %78 = arith.maximumf %76, %77 : vector<8x40xf32>
    %c0_31 = arith.constant 0 : index
    %c0_32 = arith.constant 0 : index
    %79 = vector.load %arg5[%c0_31, %c0_32] : memref<40x20xf32, #tpu.memory_space<vmem>>, vector<40x20xf32>
    %cst_33 = arith.constant dense<0.000000e+00> : vector<8x20xf32>
    %80 = tpu.matmul %78, %79, %cst_33 {dimension_numbers = #tpu.dot_dimension_numbers<[1], [0], [0], [1], [0, 0, 1, 1], [], []>} : vector<8x40xf32>, vector<40x20xf32>, vector<8x20xf32> -> vector<8x20xf32>
    %c0_34 = arith.constant 0 : index
    %c0_35 = arith.constant 0 : index
    %81 = vector.load %arg6[%c0_34, %c0_35] : memref<1x20xf32, #tpu.memory_space<vmem>>, vector<1x20xf32>
    %82 = vector.broadcast %81 : vector<1x20xf32> to vector<8x20xf32>
    %83 = arith.addf %80, %82 : vector<8x20xf32>
    %cst_36 = arith.constant 0.000000e+00 : f32
    %84 = vector.broadcast %cst_36 : f32 to vector<8x20xf32>
    %85 = arith.maximumf %83, %84 : vector<8x20xf32>
    %86 = vector.shape_cast %85 : vector<8x20xf32> to vector<8x1x20xf32>
    %87 = vector.shape_cast %86 : vector<8x1x20xf32> to vector<8x1x20xf32>
    %88 = vector.broadcast %87 : vector<8x1x20xf32> to vector<8x16x20xf32>
    %cst_37 = arith.constant dense<0.000000e+00> : vector<8x16xf32>
    %89 = vector.multi_reduction <add>, %58, %cst_37 [2] : vector<8x16x32xf32> to vector<8x16xf32>
    %90 = vector.shape_cast %89 : vector<8x16xf32> to vector<8x16x1xf32>
    %cst_38 = arith.constant 3.200000e+01 : f32
    %91 = vector.broadcast %cst_38 : f32 to vector<8x16x1xf32>
    %92 = arith.divf %90, %91 : vector<8x16x1xf32>
    %93 = vector.broadcast %92 : vector<8x16x1xf32> to vector<8x16x32xf32>
    %94 = arith.subf %58, %93 : vector<8x16x32xf32>
    %95 = arith.mulf %94, %94 : vector<8x16x32xf32>
    %cst_39 = arith.constant dense<0.000000e+00> : vector<8x16xf32>
    %96 = vector.multi_reduction <add>, %95, %cst_39 [2] : vector<8x16x32xf32> to vector<8x16xf32>
    %97 = vector.shape_cast %96 : vector<8x16xf32> to vector<8x16x1xf32>
    %cst_40 = arith.constant 3.200000e+01 : f32
    %98 = vector.broadcast %cst_40 : f32 to vector<8x16x1xf32>
    %99 = arith.divf %97, %98 : vector<8x16x1xf32>
    %cst_41 = arith.constant 9.99999974E-6 : f32
    %100 = vector.broadcast %cst_41 : f32 to vector<8x16x1xf32>
    %101 = arith.addf %99, %100 : vector<8x16x1xf32>
    %102 = math.rsqrt %101 : vector<8x16x1xf32>
    %103 = vector.broadcast %102 : vector<8x16x1xf32> to vector<8x16x32xf32>
    %104 = arith.mulf %94, %103 : vector<8x16x32xf32>
    %c0_42 = arith.constant 0 : index
    %c0_43 = arith.constant 0 : index
    %105 = vector.load %arg7[%c0_42, %c0_43] : memref<3x32xf32, #tpu.memory_space<vmem>>, vector<1x32xf32>
    %106 = vector.shape_cast %105 : vector<1x32xf32> to vector<1x1x32xf32>
    %107 = vector.broadcast %106 : vector<1x1x32xf32> to vector<8x16x32xf32>
    %108 = arith.mulf %104, %107 : vector<8x16x32xf32>
    %c0_44 = arith.constant 0 : index
    %c0_45 = arith.constant 0 : index
    %109 = vector.load %arg8[%c0_44, %c0_45] : memref<3x32xf32, #tpu.memory_space<vmem>>, vector<1x32xf32>
    %110 = vector.shape_cast %109 : vector<1x32xf32> to vector<1x1x32xf32>
    %111 = vector.broadcast %110 : vector<1x1x32xf32> to vector<8x16x32xf32>
    %112 = arith.addf %108, %111 : vector<8x16x32xf32>
    %c0_46 = arith.constant 0 : index
    %c0_47 = arith.constant 0 : index
    %c0_48 = arith.constant 0 : index
    %113 = vector.load %arg9[%c0_46, %c0_47, %c0_48] : memref<8x16x128xf32, #tpu.memory_space<vmem>>, vector<8x16x32xf32>
    tpu.vector_store %arg9[%c0_46, %c0_47, %c0_48], %112 {strides = array<i32>} : memref<8x16x128xf32, #tpu.memory_space<vmem>>, vector<8x16x32xf32>,
    %cst_49 = arith.constant dense<0.000000e+00> : vector<8x16xf32>
    %114 = vector.multi_reduction <add>, %66, %cst_49 [2] : vector<8x16x32xf32> to vector<8x16xf32>
    %115 = vector.shape_cast %114 : vector<8x16xf32> to vector<8x16x1xf32>
    %cst_50 = arith.constant 3.200000e+01 : f32
    %116 = vector.broadcast %cst_50 : f32 to vector<8x16x1xf32>
    %117 = arith.divf %115, %116 : vector<8x16x1xf32>
    %118 = vector.broadcast %117 : vector<8x16x1xf32> to vector<8x16x32xf32>
    %119 = arith.subf %66, %118 : vector<8x16x32xf32>
    %120 = arith.mulf %119, %119 : vector<8x16x32xf32>
    %cst_51 = arith.constant dense<0.000000e+00> : vector<8x16xf32>
    %121 = vector.multi_reduction <add>, %120, %cst_51 [2] : vector<8x16x32xf32> to vector<8x16xf32>
    %122 = vector.shape_cast %121 : vector<8x16xf32> to vector<8x16x1xf32>
    %cst_52 = arith.constant 3.200000e+01 : f32
    %123 = vector.broadcast %cst_52 : f32 to vector<8x16x1xf32>
    %124 = arith.divf %122, %123 : vector<8x16x1xf32>
    %cst_53 = arith.constant 9.99999974E-6 : f32
    %125 = vector.broadcast %cst_53 : f32 to vector<8x16x1xf32>
    %126 = arith.addf %124, %125 : vector<8x16x1xf32>
    %127 = math.rsqrt %126 : vector<8x16x1xf32>
    %128 = vector.broadcast %127 : vector<8x16x1xf32> to vector<8x16x32xf32>
    %129 = arith.mulf %119, %128 : vector<8x16x32xf32>
    %c1 = arith.constant 1 : index
    %c0_54 = arith.constant 0 : index
    %130 = vector.load %arg7[%c1, %c0_54] : memref<3x32xf32, #tpu.memory_space<vmem>>, vector<1x32xf32>
    %131 = vector.shape_cast %130 : vector<1x32xf32> to vector<1x1x32xf32>
    %132 = vector.broadcast %131 : vector<1x1x32xf32> to vector<8x16x32xf32>
    %133 = arith.mulf %129, %132 : vector<8x16x32xf32>
    %c1_55 = arith.constant 1 : index
    %c0_56 = arith.constant 0 : index
    %134 = vector.load %arg8[%c1_55, %c0_56] : memref<3x32xf32, #tpu.memory_space<vmem>>, vector<1x32xf32>
    %135 = vector.shape_cast %134 : vector<1x32xf32> to vector<1x1x32xf32>
    %136 = vector.broadcast %135 : vector<1x1x32xf32> to vector<8x16x32xf32>
    %137 = arith.addf %133, %136 : vector<8x16x32xf32>
    %c0_57 = arith.constant 0 : index
    %c0_58 = arith.constant 0 : index
    %c32 = arith.constant 32 : index
    %138 = vector.load %arg9[%c0_57, %c0_58, %c32] : memref<8x16x128xf32, #tpu.memory_space<vmem>>, vector<8x16x32xf32>
    tpu.vector_store %arg9[%c0_57, %c0_58, %c32], %137 {strides = array<i32>} : memref<8x16x128xf32, #tpu.memory_space<vmem>>, vector<8x16x32xf32>,
    %cst_59 = arith.constant dense<0.000000e+00> : vector<8x16xf32>
    %139 = vector.multi_reduction <add>, %68, %cst_59 [2] : vector<8x16x32xf32> to vector<8x16xf32>
    %140 = vector.shape_cast %139 : vector<8x16xf32> to vector<8x16x1xf32>
    %cst_60 = arith.constant 3.200000e+01 : f32
    %141 = vector.broadcast %cst_60 : f32 to vector<8x16x1xf32>
    %142 = arith.divf %140, %141 : vector<8x16x1xf32>
    %143 = vector.broadcast %142 : vector<8x16x1xf32> to vector<8x16x32xf32>
    %144 = arith.subf %68, %143 : vector<8x16x32xf32>
    %145 = arith.mulf %144, %144 : vector<8x16x32xf32>
    %cst_61 = arith.constant dense<0.000000e+00> : vector<8x16xf32>
    %146 = vector.multi_reduction <add>, %145, %cst_61 [2] : vector<8x16x32xf32> to vector<8x16xf32>
    %147 = vector.shape_cast %146 : vector<8x16xf32> to vector<8x16x1xf32>
    %cst_62 = arith.constant 3.200000e+01 : f32
    %148 = vector.broadcast %cst_62 : f32 to vector<8x16x1xf32>
    %149 = arith.divf %147, %148 : vector<8x16x1xf32>
    %cst_63 = arith.constant 9.99999974E-6 : f32
    %150 = vector.broadcast %cst_63 : f32 to vector<8x16x1xf32>
    %151 = arith.addf %149, %150 : vector<8x16x1xf32>
    %152 = math.rsqrt %151 : vector<8x16x1xf32>
    %153 = vector.broadcast %152 : vector<8x16x1xf32> to vector<8x16x32xf32>
    %154 = arith.mulf %144, %153 : vector<8x16x32xf32>
    %c2 = arith.constant 2 : index
    %c0_64 = arith.constant 0 : index
    %155 = vector.load %arg7[%c2, %c0_64] : memref<3x32xf32, #tpu.memory_space<vmem>>, vector<1x32xf32>
    %156 = vector.shape_cast %155 : vector<1x32xf32> to vector<1x1x32xf32>
    %157 = vector.broadcast %156 : vector<1x1x32xf32> to vector<8x16x32xf32>
    %158 = arith.mulf %154, %157 : vector<8x16x32xf32>
    %c2_65 = arith.constant 2 : index
    %c0_66 = arith.constant 0 : index
    %159 = vector.load %arg8[%c2_65, %c0_66] : memref<3x32xf32, #tpu.memory_space<vmem>>, vector<1x32xf32>
    %160 = vector.shape_cast %159 : vector<1x32xf32> to vector<1x1x32xf32>
    %161 = vector.broadcast %160 : vector<1x1x32xf32> to vector<8x16x32xf32>
    %162 = arith.addf %158, %161 : vector<8x16x32xf32>
    %c0_67 = arith.constant 0 : index
    %c0_68 = arith.constant 0 : index
    %c64 = arith.constant 64 : index
    %163 = vector.load %arg9[%c0_67, %c0_68, %c64] : memref<8x16x128xf32, #tpu.memory_space<vmem>>, vector<8x16x32xf32>
    tpu.vector_store %arg9[%c0_67, %c0_68, %c64], %162 {strides = array<i32>} : memref<8x16x128xf32, #tpu.memory_space<vmem>>, vector<8x16x32xf32>,
    %c0_69 = arith.constant 0 : index
    %c0_70 = arith.constant 0 : index
    %c96 = arith.constant 96 : index
    %164 = vector.load %arg9[%c0_69, %c0_70, %c96] : memref<8x16x128xf32, #tpu.memory_space<vmem>>, vector<8x16x20xf32>
    tpu.vector_store %arg9[%c0_69, %c0_70, %c96], %88 {strides = array<i32>} : memref<8x16x128xf32, #tpu.memory_space<vmem>>, vector<8x16x20xf32>,
    %165 = vector.extract_strided_slice %1 {offsets = [0, 0, 0], sizes = [8, 16, 1], strides = [1, 1, 1]} : vector<8x16x32xi32> to vector<8x16x1xi32>
    %166 = arith.sitofp %165 : vector<8x16x1xi32> to vector<8x16x1xf32>
    %cst_71 = arith.constant 1.000000e+00 : f32
    %167 = vector.broadcast %cst_71 : f32 to vector<8x16x1xf32>
    %168 = arith.addf %166, %167 : vector<8x16x1xf32>
    %169 = math.log %168 : vector<8x16x1xf32>
    %c0_72 = arith.constant 0 : index
    %c0_73 = arith.constant 0 : index
    %c116 = arith.constant 116 : index
    %170 = vector.load %arg9[%c0_72, %c0_73, %c116] : memref<8x16x128xf32, #tpu.memory_space<vmem>>, vector<8x16x1xf32>
    tpu.vector_store %arg9[%c0_72, %c0_73, %c116], %169 {strides = array<i32>} : memref<8x16x128xf32, #tpu.memory_space<vmem>>, vector<8x16x1xf32>,
    %cst_74 = arith.constant 1.000000e-03 : f32
    %171 = vector.broadcast %cst_74 : f32 to vector<8x16x1xf32>
    %172 = arith.mulf %166, %171 : vector<8x16x1xf32>
    %173 = math.exp %172 : vector<8x16x1xf32>
    %cst_75 = arith.constant 1.000000e+00 : f32
    %174 = vector.broadcast %cst_75 : f32 to vector<8x16x1xf32>
    %175 = arith.subf %173, %174 : vector<8x16x1xf32>
    %c0_76 = arith.constant 0 : index
    %c0_77 = arith.constant 0 : index
    %c117 = arith.constant 117 : index
    %176 = vector.load %arg9[%c0_76, %c0_77, %c117] : memref<8x16x128xf32, #tpu.memory_space<vmem>>, vector<8x16x1xf32>
    tpu.vector_store %arg9[%c0_76, %c0_77, %c117], %175 {strides = array<i32>} : memref<8x16x128xf32, #tpu.memory_space<vmem>>, vector<8x16x1xf32>,
    %cst_78 = arith.constant 0.000000e+00 : f32
    %177 = vector.broadcast %cst_78 : f32 to vector<8x16x10xf32>
    %c0_79 = arith.constant 0 : index
    %c0_80 = arith.constant 0 : index
    %c118 = arith.constant 118 : index
    %178 = vector.load %arg9[%c0_79, %c0_80, %c118] : memref<8x16x128xf32, #tpu.memory_space<vmem>>, vector<8x16x10xf32>
    tpu.vector_store %arg9[%c0_79, %c0_80, %c118], %177 {strides = array<i32>} : memref<8x16x128xf32, #tpu.memory_space<vmem>>, vector<8x16x10xf32>,
    return
  }
  func.func @transform_0(%arg0: i32) -> (i32, i32, i32) {
    %c0_i32 = arith.constant 0 : i32
    %c0_i32_0 = arith.constant 0 : i32
    %c0_i32_1 = arith.constant 0 : i32
    return %arg0, %c0_i32, %c0_i32_0 : i32, i32, i32
  }
  func.func @transform_1(%arg0: i32) -> (i32, i32) {
    %c0_i32 = arith.constant 0 : i32
    %c0_i32_0 = arith.constant 0 : i32
    return %arg0, %c0_i32 : i32, i32
  }
  func.func @transform_2(%arg0: i32) -> (i32, i32) {
    %c0_i32 = arith.constant 0 : i32
    %c0_i32_0 = arith.constant 0 : i32
    %c0_i32_1 = arith.constant 0 : i32
    return %c0_i32, %c0_i32_0 : i32, i32
  }
  func.func @transform_3(%arg0: i32) -> (i32, i32) {
    %c0_i32 = arith.constant 0 : i32
    %c0_i32_0 = arith.constant 0 : i32
    %c0_i32_1 = arith.constant 0 : i32
    return %c0_i32, %c0_i32_0 : i32, i32
  }
  func.func @transform_4(%arg0: i32) -> (i32, i32) {
    %c0_i32 = arith.constant 0 : i32
    %c0_i32_0 = arith.constant 0 : i32
    %c0_i32_1 = arith.constant 0 : i32
    return %c0_i32, %c0_i32_0 : i32, i32
  }
  func.func @transform_5(%arg0: i32) -> (i32, i32) {
    %c0_i32 = arith.constant 0 : i32
    %c0_i32_0 = arith.constant 0 : i32
    %c0_i32_1 = arith.constant 0 : i32
    return %c0_i32, %c0_i32_0 : i32, i32
  }
  func.func @transform_6(%arg0: i32) -> (i32, i32) {
    %c0_i32 = arith.constant 0 : i32
    %c0_i32_0 = arith.constant 0 : i32
    %c0_i32_1 = arith.constant 0 : i32
    return %c0_i32, %c0_i32_0 : i32, i32
  }
  func.func @transform_7(%arg0: i32) -> (i32, i32) {
    %c0_i32 = arith.constant 0 : i32
    %c0_i32_0 = arith.constant 0 : i32
    %c0_i32_1 = arith.constant 0 : i32
    return %c0_i32, %c0_i32_0 : i32, i32
  }
  func.func @transform_8(%arg0: i32) -> (i32, i32, i32) {
    %c0_i32 = arith.constant 0 : i32
    %c0_i32_0 = arith.constant 0 : i32
    %c0_i32_1 = arith.constant 0 : i32
    return %arg0, %c0_i32, %c0_i32_0 : i32, i32, i32
  }
  func.func @transform_9(%arg0: i32) -> (i32, i32, i32) {
    %c0_i32 = arith.constant 0 : i32
    %c0_i32_0 = arith.constant 0 : i32
    %c0_i32_1 = arith.constant 0 : i32
    return %arg0, %c0_i32, %c0_i32_0 : i32, i32, i32
  }
  func.func @transform_10(%arg0: i32) -> (i32, i32, i32) {
    %c0_i32 = arith.constant 0 : i32
    %c0_i32_0 = arith.constant 0 : i32
    %c0_i32_1 = arith.constant 0 : i32
    return %arg0, %c0_i32, %c0_i32_0 : i32, i32, i32
  }
}

</mosaic_0001>

<llo_original>
// kernel: tpu_custom_call.1
$region0: #{tpu_custom_call.1}
  #allocation0 [shape = 'u32[]', space=smem, size = 0x4, offset = 0x4, fixed_abs, tag = 'smem constant byte address 0x4 - core index']
  #allocation1 [shape = 'u32[72,128]{1,0:T(1,128)}', space=vmem, size = 0x9000, scoped, tag = 'internal scratch']
  %s0 = inlined_call_operand.hbm [shape: f32[8,16,32], index: 0, kind: input, shape index: {}]
  %s1 = inlined_call_operand.vmem [shape: f32[8,8], index: 1, kind: input, shape index: {}]
  %s2 = inlined_call_operand.vmem [shape: f32[8,40], index: 2, kind: input, shape index: {}]
  %s3 = inlined_call_operand.vmem [shape: f32[1,40], index: 3, kind: input, shape index: {}]
  %s4 = inlined_call_operand.vmem [shape: f32[40,20], index: 4, kind: input, shape index: {}]
  %s5 = inlined_call_operand.vmem [shape: f32[1,20], index: 5, kind: input, shape index: {}]
  %s6 = inlined_call_operand.vmem [shape: f32[3,32], index: 6, kind: input, shape index: {}]
  %s7 = inlined_call_operand.vmem [shape: f32[3,32], index: 7, kind: input, shape index: {}]
  %s8 = inlined_call_operand.hbm [shape: f32[8,16,128], index: 8, kind: output, shape index: {0}]
  %s9 = inlined_call_operand.hbm [shape: f32[8,16,32], index: 9, kind: output, shape index: {1}]
  %s10 = inlined_call_operand.hbm [shape: s32[8,16,32], index: 10, kind: output, shape index: {2}]
  %11 = xla_tuple %s8, %s9, %s10
  %s12 = sld [smem:[#allocation0]]
  $region62: #{tpu_custom_call.1} parent=0
    _
  %s14 = ssub.s32 1, %s12
  %s15 = scalar_select 0, %s14, %s12
  $region1: #{tpu_custom_call.1} parent=0
    #allocation2 [shape = 'u8[65536]{0}', space=vmem, size = 0x10000, scoped, tag = 'input window, operand 0, single buffered']
    #allocation3 [shape = 's32[1]{0}', space=sflag, size = 0x4, scoped, tag = 'scoped memory for tpu_custom_call.1']
    #allocation4 [shape = 's32[1]{0}', space=sflag, size = 0x4, scoped, tag = 'scoped memory for tpu_custom_call.1']
    #allocation5 [shape = 'u8[65536]{0}', space=vmem, size = 0x10000, scoped, tag = 'output window, operand 0, single buffered']
    #allocation6 [shape = 'u8[65536]{0}', space=vmem, size = 0x10000, scoped, tag = 'output window, operand 1, single buffered']
    #allocation7 [shape = 's32[1]{0}', space=sflag, size = 0x4, scoped, tag = 'scoped memory for tpu_custom_call.1']
    #allocation8 [shape = 'u8[65536]{0}', space=vmem, size = 0x10000, scoped, tag = 'output window, operand 2, single buffered']
    %16 = vsyncpa [#allocation3], 0
    %17 = vsyncpa [#allocation4], 0
    %18 = vsyncpa [#allocation7], 0
    // Predicated region
    $region2: #{tpu_custom_call.1} parent=1 // pred_check
      _
    $region3: #{tpu_custom_call.1} parent=1 // pred_check_branch
      %20 = sbr.rel (0) target = $region5
    $region4: #{tpu_custom_call.1} parent=1 // pred_region
      %22 = vsyncadd [#allocation3], 0
      %s23 = sshll.u32 %s0, 4
      %s24 = int_to_ptr.hbm [resolvable:$true] %s23
      %s25 = sshll.u32 [#allocation2], 4
      %s26 = int_to_ptr.vmem [resolvable:$true] %s25
      %31 = dma.hbm_to_vmem [thread:$0]  %s24, 2048, %s26, [#allocation3], 128, 128, 8
    $region5: #{tpu_custom_call.1} parent=1 // pred_fallthru
      _
    // Predicated region
    $region6: #{tpu_custom_call.1} parent=1 // pred_check
      _
    $region7: #{tpu_custom_call.1} parent=1 // pred_check_branch
      %33 = sbr.rel (0) target = $region9
    $region8: #{tpu_custom_call.1} parent=1 // pred_region
      _
    $region9: #{tpu_custom_call.1} parent=1 // pred_fallthru
      _
    // Predicated region
    $region10: #{tpu_custom_call.1} parent=1 // pred_check
      _
    $region11: #{tpu_custom_call.1} parent=1 // pred_check_branch
      %35 = sbr.rel (0) target = $region13
    $region12: #{tpu_custom_call.1} parent=1 // pred_region
      _
    $region13: #{tpu_custom_call.1} parent=1 // pred_fallthru
      _
    // Predicated region
    $region14: #{tpu_custom_call.1} parent=1 // pred_check
      _
    $region15: #{tpu_custom_call.1} parent=1 // pred_check_branch
      %37 = sbr.rel (0) target = $region17
    $region16: #{tpu_custom_call.1} parent=1 // pred_region
      _
    $region17: #{tpu_custom_call.1} parent=1 // pred_fallthru
      _
    // Predicated region
    $region18: #{tpu_custom_call.1} parent=1 // pred_check
      _
    $region19: #{tpu_custom_call.1} parent=1 // pred_check_branch
      %39 = sbr.rel (0) target = $region21
    $region20: #{tpu_custom_call.1} parent=1 // pred_region
      _
    $region21: #{tpu_custom_call.1} parent=1 // pred_fallthru
      _
    // Predicated region
    $region22: #{tpu_custom_call.1} parent=1 // pred_check
      _
    $region23: #{tpu_custom_call.1} parent=1 // pred_check_branch
      %41 = sbr.rel (0) target = $region25
    $region24: #{tpu_custom_call.1} parent=1 // pred_region
      _
    $region25: #{tpu_custom_call.1} parent=1 // pred_fallthru
      _
    // Predicated region
    $region26: #{tpu_custom_call.1} parent=1 // pred_check
      _
    $region27: #{tpu_custom_call.1} parent=1 // pred_check_branch
      %43 = sbr.rel (0) target = $region29
    $region28: #{tpu_custom_call.1} parent=1 // pred_region
      _
    $region29: #{tpu_custom_call.1} parent=1 // pred_fallthru
      _
    // Predicated region
    $region30: #{tpu_custom_call.1} parent=1 // pred_check
      _
    $region31: #{tpu_custom_call.1} parent=1 // pred_check_branch
      %45 = sbr.rel (0) target = $region33
    $region32: #{tpu_custom_call.1} parent=1 // pred_region
      _
    $region33: #{tpu_custom_call.1} parent=1 // pred_fallthru
      _
    // Predicated region
    $region34: #{tpu_custom_call.1} parent=1 // pred_check
      _
    $region35: #{tpu_custom_call.1} parent=1 // pred_check_branch
      %47 = sbr.rel (0) target = $region37
    $region36: #{tpu_custom_call.1} parent=1 // pred_region
      %49 = dma.done [#allocation3], 2048
    $region37: #{tpu_custom_call.1} parent=1 // pred_fallthru
      _
    %v50 = vld [vmem:[#allocation2] sm:$0xff]
    %v51 = vld [vmem:[#allocation2 + $0x8] sm:$0xff]
    %v52 = vld [vmem:[#allocation2 + $0x10] sm:$0xff]
    %v53 = vld [vmem:[#allocation2 + $0x18] sm:$0xff]
    %v54 = vld [vmem:[#allocation2 + $0x20] sm:$0xff]
    %v55 = vld [vmem:[#allocation2 + $0x28] sm:$0xff]
    %v56 = vld [vmem:[#allocation2 + $0x30] sm:$0xff]
    %v57 = vld [vmem:[#allocation2 + $0x38] sm:$0xff]
    %v58 = vld [vmem:[#allocation2 + $0x40] sm:$0xff]
    %v59 = vld [vmem:[#allocation2 + $0x48] sm:$0xff]
    %v60 = vld [vmem:[#allocation2 + $0x50] sm:$0xff]
    %v61 = vld [vmem:[#allocation2 + $0x58] sm:$0xff]
    %v62 = vld [vmem:[#allocation2 + $0x60] sm:$0xff]
    %v63 = vld [vmem:[#allocation2 + $0x68] sm:$0xff]
    %v64 = vld [vmem:[#allocation2 + $0x70] sm:$0xff]
    %v65 = vld [vmem:[#allocation2 + $0x78] sm:$0xff]
    %v66 = vlaneseq
    %v67 = vshrl.u32 %v66, 7
    %v68 = vadd.s32 %v67, 8
    %vm85 = vcmask 1040384
    %v86 = vrot.slane %v50, 7
    %v87 = vrot.slane %v51, 7
    %v88 = vsel %vm85, %v86, %v87
    %v89 = vrot.slane %v52, 7
    %v90 = vrot.slane %v53, 7
    %v91 = vsel %vm85, %v89, %v90
    %v92 = vrot.slane %v54, 7
    %v93 = vrot.slane %v55, 7
    %v94 = vsel %vm85, %v92, %v93
    %v95 = vrot.slane %v56, 7
    %v96 = vrot.slane %v57, 7
    %v97 = vsel %vm85, %v95, %v96
    %v98 = vrot.slane %v58, 7
    %v99 = vrot.slane %v59, 7
    %v100 = vsel %vm85, %v98, %v99
    %v101 = vrot.slane %v60, 7
    %v102 = vrot.slane %v61, 7
    %v103 = vsel %vm85, %v101, %v102
    %v104 = vrot.slane %v62, 7
    %v105 = vrot.slane %v63, 7
    %v106 = vsel %vm85, %v104, %v105
    %v107 = vrot.slane %v64, 7
    %v108 = vrot.slane %v65, 7
    %v109 = vsel %vm85, %v107, %v108
    %v126 = vsel %vm85, 0.0, %v86
    %v127 = vsel %vm85, 0.0, %v89
    %v128 = vsel %vm85, 0.0, %v92
    %v129 = vsel %vm85, 0.0, %v95
    %v130 = vsel %vm85, 0.0, %v98
    %v131 = vsel %vm85, 0.0, %v101
    %v132 = vsel %vm85, 0.0, %v104
    %v133 = vsel %vm85, 0.0, %v107
    %v134 = vadd.f32 %v50, %v126
    %v135 = vadd.f32 %v51, %v88
    %v136 = vadd.f32 %v52, %v127
    %v137 = vadd.f32 %v53, %v91
    %v138 = vadd.f32 %v54, %v128
    %v139 = vadd.f32 %v55, %v94
    %v140 = vadd.f32 %v56, %v129
    %v141 = vadd.f32 %v57, %v97
    %v142 = vadd.f32 %v58, %v130
    %v143 = vadd.f32 %v59, %v100
    %v144 = vadd.f32 %v60, %v131
    %v145 = vadd.f32 %v61, %v103
    %v146 = vadd.f32 %v62, %v132
    %v147 = vadd.f32 %v63, %v106
    %v148 = vadd.f32 %v64, %v133
    %v149 = vadd.f32 %v65, %v109
    %v150 = vsel %vm85, -inf, %v86
    %v151 = vsel %vm85, -inf, %v89
    %v152 = vsel %vm85, -inf, %v92
    %v153 = vsel %vm85, -inf, %v95
    %v154 = vsel %vm85, -inf, %v98
    %v155 = vsel %vm85, -inf, %v101
    %v156 = vsel %vm85, -inf, %v104
    %v157 = vsel %vm85, -inf, %v107
    %v158 = vrot.slane %v67, 7
    %v159 = vrot.slane %v68, 7
    %v160 = vsel %vm85, %v158, %v159
    %v161 = vsel %vm85, 0, %v158
    %vm162 = vcmp.ge.f32.partialorder %v150, %v50
    %vm163 = vcmp.ge.f32.partialorder %v88, %v51
    %vm164 = vcmp.ge.f32.partialorder %v151, %v52
    %vm165 = vcmp.ge.f32.partialorder %v91, %v53
    %vm166 = vcmp.ge.f32.partialorder %v152, %v54
    %vm167 = vcmp.ge.f32.partialorder %v94, %v55
    %vm168 = vcmp.ge.f32.partialorder %v153, %v56
    %vm169 = vcmp.ge.f32.partialorder %v97, %v57
    %vm170 = vcmp.ge.f32.partialorder %v154, %v58
    %vm171 = vcmp.ge.f32.partialorder %v100, %v59
    %vm172 = vcmp.ge.f32.partialorder %v155, %v60
    %vm173 = vcmp.ge.f32.partialorder %v103, %v61
    %vm174 = vcmp.ge.f32.partialorder %v156, %v62
    %vm175 = vcmp.ge.f32.partialorder %v106, %v63
    %vm176 = vcmp.ge.f32.partialorder %v157, %v64
    %vm177 = vcmp.ge.f32.partialorder %v109, %v65
    %v178 = vsel %vm162, %v161, %v67
    %v179 = vsel %vm163, %v160, %v68
    %v180 = vsel %vm164, %v161, %v67
    %v181 = vsel %vm165, %v160, %v68
    %v182 = vsel %vm166, %v161, %v67
    %v183 = vsel %vm167, %v160, %v68
    %v184 = vsel %vm168, %v161, %v67
    %v185 = vsel %vm169, %v160, %v68
    %v186 = vsel %vm170, %v161, %v67
    %v187 = vsel %vm171, %v160, %v68
    %v188 = vsel %vm172, %v161, %v67
    %v189 = vsel %vm173, %v160, %v68
    %v190 = vsel %vm174, %v161, %v67
    %v191 = vsel %vm175, %v160, %v68
    %v192 = vsel %vm176, %v161, %v67
    %v193 = vsel %vm177, %v160, %v68
    %v194 = vmax.f32 %v50, %v150
    %v195 = vmax.f32 %v51, %v88
    %v196 = vmax.f32 %v52, %v151
    %v197 = vmax.f32 %v53, %v91
    %v198 = vmax.f32 %v54, %v152
    %v199 = vmax.f32 %v55, %v94
    %v200 = vmax.f32 %v56, %v153
    %v201 = vmax.f32 %v57, %v97
    %v202 = vmax.f32 %v58, %v154
    %v203 = vmax.f32 %v59, %v100
    %v204 = vmax.f32 %v60, %v155
    %v205 = vmax.f32 %v61, %v103
    %v206 = vmax.f32 %v62, %v156
    %v207 = vmax.f32 %v63, %v106
    %v208 = vmax.f32 %v64, %v157
    %v209 = vmax.f32 %v65, %v109
    %vm226 = vcmask 1041408
    %v227 = vrot.slane %v134, 6
    %v228 = vrot.slane %v135, 6
    %v229 = vsel %vm226, %v227, %v228
    %v230 = vrot.slane %v136, 6
    %v231 = vrot.slane %v137, 6
    %v232 = vsel %vm226, %v230, %v231
    %v233 = vrot.slane %v138, 6
    %v234 = vrot.slane %v139, 6
    %v235 = vsel %vm226, %v233, %v234
    %v236 = vrot.slane %v140, 6
    %v237 = vrot.slane %v141, 6
    %v238 = vsel %vm226, %v236, %v237
    %v239 = vrot.slane %v142, 6
    %v240 = vrot.slane %v143, 6
    %v241 = vsel %vm226, %v239, %v240
    %v242 = vrot.slane %v144, 6
    %v243 = vrot.slane %v145, 6
    %v244 = vsel %vm226, %v242, %v243
    %v245 = vrot.slane %v146, 6
    %v246 = vrot.slane %v147, 6
    %v247 = vsel %vm226, %v245, %v246
    %v248 = vrot.slane %v148, 6
    %v249 = vrot.slane %v149, 6
    %v250 = vsel %vm226, %v248, %v249
    %v267 = vsel %vm226, 0.0, %v227
    %v268 = vsel %vm226, 0.0, %v230
    %v269 = vsel %vm226, 0.0, %v233
    %v270 = vsel %vm226, 0.0, %v236
    %v271 = vsel %vm226, 0.0, %v239
    %v272 = vsel %vm226, 0.0, %v242
    %v273 = vsel %vm226, 0.0, %v245
    %v274 = vsel %vm226, 0.0, %v248
    %v275 = vadd.f32 %v134, %v267
    %v276 = vadd.f32 %v135, %v229
    %v277 = vadd.f32 %v136, %v268
    %v278 = vadd.f32 %v137, %v232
    %v279 = vadd.f32 %v138, %v269
    %v280 = vadd.f32 %v139, %v235
    %v281 = vadd.f32 %v140, %v270
    %v282 = vadd.f32 %v141, %v238
    %v283 = vadd.f32 %v142, %v271
    %v284 = vadd.f32 %v143, %v241
    %v285 = vadd.f32 %v144, %v272
    %v286 = vadd.f32 %v145, %v244
    %v287 = vadd.f32 %v146, %v273
    %v288 = vadd.f32 %v147, %v247
    %v289 = vadd.f32 %v148, %v274
    %v290 = vadd.f32 %v149, %v250
    %v307 = vrot.slane %v194, 6
    %v308 = vrot.slane %v195, 6
    %v309 = vsel %vm226, %v307, %v308
    %v310 = vrot.slane %v196, 6
    %v311 = vrot.slane %v197, 6
    %v312 = vsel %vm226, %v310, %v311
    %v313 = vrot.slane %v198, 6
    %v314 = vrot.slane %v199, 6
    %v315 = vsel %vm226, %v313, %v314
    %v316 = vrot.slane %v200, 6
    %v317 = vrot.slane %v201, 6
    %v318 = vsel %vm226, %v316, %v317
    %v319 = vrot.slane %v202, 6
    %v320 = vrot.slane %v203, 6
    %v321 = vsel %vm226, %v319, %v320
    %v322 = vrot.slane %v204, 6
    %v323 = vrot.slane %v205, 6
    %v324 = vsel %vm226, %v322, %v323
    %v325 = vrot.slane %v206, 6
    %v326 = vrot.slane %v207, 6
    %v327 = vsel %vm226, %v325, %v326
    %v328 = vrot.slane %v208, 6
    %v329 = vrot.slane %v209, 6
    %v330 = vsel %vm226, %v328, %v329
    %v347 = vsel %vm226, -inf, %v307
    %v348 = vsel %vm226, -inf, %v310
    %v349 = vsel %vm226, -inf, %v313
    %v350 = vsel %vm226, -inf, %v316
    %v351 = vsel %vm226, -inf, %v319
    %v352 = vsel %vm226, -inf, %v322
    %v353 = vsel %vm226, -inf, %v325
    %v354 = vsel %vm226, -inf, %v328
    %v355 = vrot.slane %v178, 6
    %v356 = vrot.slane %v179, 6
    %v357 = vsel %vm226, %v355, %v356
    %v358 = vrot.slane %v180, 6
    %v359 = vrot.slane %v181, 6
    %v360 = vsel %vm226, %v358, %v359
    %v361 = vrot.slane %v182, 6
    %v362 = vrot.slane %v183, 6
    %v363 = vsel %vm226, %v361, %v362
    %v364 = vrot.slane %v184, 6
    %v365 = vrot.slane %v185, 6
    %v366 = vsel %vm226, %v364, %v365
    %v367 = vrot.slane %v186, 6
    %v368 = vrot.slane %v187, 6
    %v369 = vsel %vm226, %v367, %v368
    %v370 = vrot.slane %v188, 6
    %v371 = vrot.slane %v189, 6
    %v372 = vsel %vm226, %v370, %v371
    %v373 = vrot.slane %v190, 6
    %v374 = vrot.slane %v191, 6
    %v375 = vsel %vm226, %v373, %v374
    %v376 = vrot.slane %v192, 6
    %v377 = vrot.slane %v193, 6
    %v378 = vsel %vm226, %v376, %v377
    %v379 = vsel %vm226, 0, %v355
    %v380 = vsel %vm226, 0, %v358
    %v381 = vsel %vm226, 0, %v361
    %v382 = vsel %vm226, 0, %v364
    %v383 = vsel %vm226, 0, %v367
    %v384 = vsel %vm226, 0, %v370
    %v385 = vsel %vm226, 0, %v373
    %v386 = vsel %vm226, 0, %v376
    %vm387 = vcmp.ge.f32.partialorder %v347, %v194
    %vm388 = vcmp.ge.f32.partialorder %v309, %v195
    %vm389 = vcmp.ge.f32.partialorder %v348, %v196
    %vm390 = vcmp.ge.f32.partialorder %v312, %v197
    %vm391 = vcmp.ge.f32.partialorder %v349, %v198
    %vm392 = vcmp.ge.f32.partialorder %v315, %v199
    %vm393 = vcmp.ge.f32.partialorder %v350, %v200
    %vm394 = vcmp.ge.f32.partialorder %v318, %v201
    %vm395 = vcmp.ge.f32.partialorder %v351, %v202
    %vm396 = vcmp.ge.f32.partialorder %v321, %v203
    %vm397 = vcmp.ge.f32.partialorder %v352, %v204
    %vm398 = vcmp.ge.f32.partialorder %v324, %v205
    %vm399 = vcmp.ge.f32.partialorder %v353, %v206
    %vm400 = vcmp.ge.f32.partialorder %v327, %v207
    %vm401 = vcmp.ge.f32.partialorder %v354, %v208
    %vm402 = vcmp.ge.f32.partialorder %v330, %v209
    %v403 = vsel %vm387, %v379, %v178
    %v404 = vsel %vm388, %v357, %v179
    %v405 = vsel %vm389, %v380, %v180
    %v406 = vsel %vm390, %v360, %v181
    %v407 = vsel %vm391, %v381, %v182
    %v408 = vsel %vm392, %v363, %v183
    %v409 = vsel %vm393, %v382, %v184
    %v410 = vsel %vm394, %v366, %v185
    %v411 = vsel %vm395, %v383, %v186
    %v412 = vsel %vm396, %v369, %v187
    %v413 = vsel %vm397, %v384, %v188
    %v414 = vsel %vm398, %v372, %v189
    %v415 = vsel %vm399, %v385, %v190
    %v416 = vsel %vm400, %v375, %v191
    %v417 = vsel %vm401, %v386, %v192
    %v418 = vsel %vm402, %v378, %v193
    %v419 = vmax.f32 %v194, %v347
    %v420 = vmax.f32 %v195, %v309
    %v421 = vmax.f32 %v196, %v348
    %v422 = vmax.f32 %v197, %v312
    %v423 = vmax.f32 %v198, %v349
    %v424 = vmax.f32 %v199, %v315
    %v425 = vmax.f32 %v200, %v350
    %v426 = vmax.f32 %v201, %v318
    %v427 = vmax.f32 %v202, %v351
    %v428 = vmax.f32 %v203, %v321
    %v429 = vmax.f32 %v204, %v352
    %v430 = vmax.f32 %v205, %v324
    %v431 = vmax.f32 %v206, %v353
    %v432 = vmax.f32 %v207, %v327
    %v433 = vmax.f32 %v208, %v354
    %v434 = vmax.f32 %v209, %v330
    %vm451 = vcmask 1043456
    %v452 = vrot.slane %v275, 4
    %v453 = vrot.slane %v276, 4
    %v454 = vsel %vm451, %v452, %v453
    %v455 = vrot.slane %v277, 4
    %v456 = vrot.slane %v278, 4
    %v457 = vsel %vm451, %v455, %v456
    %v458 = vrot.slane %v279, 4
    %v459 = vrot.slane %v280, 4
    %v460 = vsel %vm451, %v458, %v459
    %v461 = vrot.slane %v281, 4
    %v462 = vrot.slane %v282, 4
    %v463 = vsel %vm451, %v461, %v462
    %v464 = vrot.slane %v283, 4
    %v465 = vrot.slane %v284, 4
    %v466 = vsel %vm451, %v464, %v465
    %v467 = vrot.slane %v285, 4
    %v468 = vrot.slane %v286, 4
    %v469 = vsel %vm451, %v467, %v468
    %v470 = vrot.slane %v287, 4
    %v471 = vrot.slane %v288, 4
    %v472 = vsel %vm451, %v470, %v471
    %v473 = vrot.slane %v289, 4
    %v474 = vrot.slane %v290, 4
    %v475 = vsel %vm451, %v473, %v474
    %v492 = vsel %vm451, 0.0, %v452
    %v493 = vsel %vm451, 0.0, %v455
    %v494 = vsel %vm451, 0.0, %v458
    %v495 = vsel %vm451, 0.0, %v461
    %v496 = vsel %vm451, 0.0, %v464
    %v497 = vsel %vm451, 0.0, %v467
    %v498 = vsel %vm451, 0.0, %v470
    %v499 = vsel %vm451, 0.0, %v473
    %v500 = vadd.f32 %v275, %v492
    %v501 = vadd.f32 %v276, %v454
    %v502 = vadd.f32 %v277, %v493
    %v503 = vadd.f32 %v278, %v457
    %v504 = vadd.f32 %v279, %v494
    %v505 = vadd.f32 %v280, %v460
    %v506 = vadd.f32 %v281, %v495
    %v507 = vadd.f32 %v282, %v463
    %v508 = vadd.f32 %v283, %v496
    %v509 = vadd.f32 %v284, %v466
    %v510 = vadd.f32 %v285, %v497
    %v511 = vadd.f32 %v286, %v469
    %v512 = vadd.f32 %v287, %v498
    %v513 = vadd.f32 %v288, %v472
    %v514 = vadd.f32 %v289, %v499
    %v515 = vadd.f32 %v290, %v475
    %v532 = vrot.slane %v419, 4
    %v533 = vrot.slane %v420, 4
    %v534 = vsel %vm451, %v532, %v533
    %v535 = vrot.slane %v421, 4
    %v536 = vrot.slane %v422, 4
    %v537 = vsel %vm451, %v535, %v536
    %v538 = vrot.slane %v423, 4
    %v539 = vrot.slane %v424, 4
    %v540 = vsel %vm451, %v538, %v539
    %v541 = vrot.slane %v425, 4
    %v542 = vrot.slane %v426, 4
    %v543 = vsel %vm451, %v541, %v542
    %v544 = vrot.slane %v427, 4
    %v545 = vrot.slane %v428, 4
    %v546 = vsel %vm451, %v544, %v545
    %v547 = vrot.slane %v429, 4
    %v548 = vrot.slane %v430, 4
    %v549 = vsel %vm451, %v547, %v548
    %v550 = vrot.slane %v431, 4
    %v551 = vrot.slane %v432, 4
    %v552 = vsel %vm451, %v550, %v551
    %v553 = vrot.slane %v433, 4
    %v554 = vrot.slane %v434, 4
    %v555 = vsel %vm451, %v553, %v554
    %v572 = vsel %vm451, -inf, %v532
    %v573 = vsel %vm451, -inf, %v535
    %v574 = vsel %vm451, -inf, %v538
    %v575 = vsel %vm451, -inf, %v541
    %v576 = vsel %vm451, -inf, %v544
    %v577 = vsel %vm451, -inf, %v547
    %v578 = vsel %vm451, -inf, %v550
    %v579 = vsel %vm451, -inf, %v553
    %v580 = vrot.slane %v403, 4
    %v581 = vrot.slane %v404, 4
    %v582 = vsel %vm451, %v580, %v581
    %v583 = vrot.slane %v405, 4
    %v584 = vrot.slane %v406, 4
    %v585 = vsel %vm451, %v583, %v584
    %v586 = vrot.slane %v407, 4
    %v587 = vrot.slane %v408, 4
    %v588 = vsel %vm451, %v586, %v587
    %v589 = vrot.slane %v409, 4
    %v590 = vrot.slane %v410, 4
    %v591 = vsel %vm451, %v589, %v590
    %v592 = vrot.slane %v411, 4
    %v593 = vrot.slane %v412, 4
    %v594 = vsel %vm451, %v592, %v593
    %v595 = vrot.slane %v413, 4
    %v596 = vrot.slane %v414, 4
    %v597 = vsel %vm451, %v595, %v596
    %v598 = vrot.slane %v415, 4
    %v599 = vrot.slane %v416, 4
    %v600 = vsel %vm451, %v598, %v599
    %v601 = vrot.slane %v417, 4
    %v602 = vrot.slane %v418, 4
    %v603 = vsel %vm451, %v601, %v602
    %v604 = vsel %vm451, 0, %v580
    %v605 = vsel %vm451, 0, %v583
    %v606 = vsel %vm451, 0, %v586
    %v607 = vsel %vm451, 0, %v589
    %v608 = vsel %vm451, 0, %v592
    %v609 = vsel %vm451, 0, %v595
    %v610 = vsel %vm451, 0, %v598
    %v611 = vsel %vm451, 0, %v601
    %vm612 = vcmp.ge.f32.partialorder %v572, %v419
    %vm613 = vcmp.ge.f32.partialorder %v534, %v420
    %vm614 = vcmp.ge.f32.partialorder %v573, %v421
    %vm615 = vcmp.ge.f32.partialorder %v537, %v422
    %vm616 = vcmp.ge.f32.partialorder %v574, %v423
    %vm617 = vcmp.ge.f32.partialorder %v540, %v424
    %vm618 = vcmp.ge.f32.partialorder %v575, %v425
    %vm619 = vcmp.ge.f32.partialorder %v543, %v426
    %vm620 = vcmp.ge.f32.partialorder %v576, %v427
    %vm621 = vcmp.ge.f32.partialorder %v546, %v428
    %vm622 = vcmp.ge.f32.partialorder %v577, %v429
    %vm623 = vcmp.ge.f32.partialorder %v549, %v430
    %vm624 = vcmp.ge.f32.partialorder %v578, %v431
    %vm625 = vcmp.ge.f32.partialorder %v552, %v432
    %vm626 = vcmp.ge.f32.partialorder %v579, %v433
    %vm627 = vcmp.ge.f32.partialorder %v555, %v434
    %v628 = vsel %vm612, %v604, %v403
    %v629 = vsel %vm613, %v582, %v404
    %v630 = vsel %vm614, %v605, %v405
    %v631 = vsel %vm615, %v585, %v406
    %v632 = vsel %vm616, %v606, %v407
    %v633 = vsel %vm617, %v588, %v408
    %v634 = vsel %vm618, %v607, %v409
    %v635 = vsel %vm619, %v591, %v410
    %v636 = vsel %vm620, %v608, %v411
    %v637 = vsel %vm621, %v594, %v412
    %v638 = vsel %vm622, %v609, %v413
    %v639 = vsel %vm623, %v597, %v414
    %v640 = vsel %vm624, %v610, %v415
    %v641 = vsel %vm625, %v600, %v416
    %v642 = vsel %vm626, %v611, %v417
    %v643 = vsel %vm627, %v603, %v418
    %v644 = vmax.f32 %v419, %v572
    %v645 = vmax.f32 %v420, %v534
    %v646 = vmax.f32 %v421, %v573
    %v647 = vmax.f32 %v422, %v537
    %v648 = vmax.f32 %v423, %v574
    %v649 = vmax.f32 %v424, %v540
    %v650 = vmax.f32 %v425, %v575
    %v651 = vmax.f32 %v426, %v543
    %v652 = vmax.f32 %v427, %v576
    %v653 = vmax.f32 %v428, %v546
    %v654 = vmax.f32 %v429, %v577
    %v655 = vmax.f32 %v430, %v549
    %v656 = vmax.f32 %v431, %v578
    %v657 = vmax.f32 %v432, %v552
    %v658 = vmax.f32 %v433, %v579
    %v659 = vmax.f32 %v434, %v555
    %v660 = vadd.f32 %v500, 0.0
    %v661 = vadd.f32 %v501, %v500
    %v662 = vadd.f32 %v502, 0.0
    %v663 = vadd.f32 %v503, %v502
    %v664 = vadd.f32 %v504, 0.0
    %v665 = vadd.f32 %v505, %v504
    %v666 = vadd.f32 %v506, 0.0
    %v667 = vadd.f32 %v507, %v506
    %v668 = vadd.f32 %v508, 0.0
    %v669 = vadd.f32 %v509, %v508
    %v670 = vadd.f32 %v510, 0.0
    %v671 = vadd.f32 %v511, %v510
    %v672 = vadd.f32 %v512, 0.0
    %v673 = vadd.f32 %v513, %v512
    %v674 = vadd.f32 %v514, 0.0
    %v675 = vadd.f32 %v515, %v514
    %vm676 = vcmp.ge.f32.partialorder -inf, %v644
    %vm677 = vcmp.ge.f32.partialorder %v644, %v645
    %vm678 = vcmp.ge.f32.partialorder -inf, %v646
    %vm679 = vcmp.ge.f32.partialorder %v646, %v647
    %vm680 = vcmp.ge.f32.partialorder -inf, %v648
    %vm681 = vcmp.ge.f32.partialorder %v648, %v649
    %vm682 = vcmp.ge.f32.partialorder -inf, %v650
    %vm683 = vcmp.ge.f32.partialorder %v650, %v651
    %vm684 = vcmp.ge.f32.partialorder -inf, %v652
    %vm685 = vcmp.ge.f32.partialorder %v652, %v653
    %vm686 = vcmp.ge.f32.partialorder -inf, %v654
    %vm687 = vcmp.ge.f32.partialorder %v654, %v655
    %vm688 = vcmp.ge.f32.partialorder -inf, %v656
    %vm689 = vcmp.ge.f32.partialorder %v656, %v657
    %vm690 = vcmp.ge.f32.partialorder -inf, %v658
    %vm691 = vcmp.ge.f32.partialorder %v658, %v659
    %v692 = vsel %vm676, 0, %v628
    %v693 = vsel %vm677, %v628, %v629
    %v694 = vsel %vm678, 0, %v630
    %v695 = vsel %vm679, %v630, %v631
    %v696 = vsel %vm680, 0, %v632
    %v697 = vsel %vm681, %v632, %v633
    %v698 = vsel %vm682, 0, %v634
    %v699 = vsel %vm683, %v634, %v635
    %v700 = vsel %vm684, 0, %v636
    %v701 = vsel %vm685, %v636, %v637
    %v702 = vsel %vm686, 0, %v638
    %v703 = vsel %vm687, %v638, %v639
    %v704 = vsel %vm688, 0, %v640
    %v705 = vsel %vm689, %v640, %v641
    %v706 = vsel %vm690, 0, %v642
    %v707 = vsel %vm691, %v642, %v643
    %v708 = vmax.f32 %v645, %v644
    %v709 = vmax.f32 %v647, %v646
    %v710 = vmax.f32 %v649, %v648
    %v711 = vmax.f32 %v651, %v650
    %v712 = vmax.f32 %v653, %v652
    %v713 = vmax.f32 %v655, %v654
    %v714 = vmax.f32 %v657, %v656
    %v715 = vmax.f32 %v659, %v658
    %vm716 = vcmp.lt.s32.totalorder %v67, 15
    %vm717 = vcmp.lt.s32.totalorder %v68, 15
    %v718 = vmax.f32 %v644, 0.0
    %v719 = vmax.f32 %v708, 0.0
    %v720 = vmax.f32 %v646, 0.0
    %v721 = vmax.f32 %v709, 0.0
    %v722 = vmax.f32 %v648, 0.0
    %v723 = vmax.f32 %v710, 0.0
    %v724 = vmax.f32 %v650, 0.0
    %v725 = vmax.f32 %v711, 0.0
    %v726 = vmax.f32 %v652, 0.0
    %v727 = vmax.f32 %v712, 0.0
    %v728 = vmax.f32 %v654, 0.0
    %v729 = vmax.f32 %v713, 0.0
    %v730 = vmax.f32 %v656, 0.0
    %v731 = vmax.f32 %v714, 0.0
    %v732 = vmax.f32 %v658, 0.0
    %v733 = vmax.f32 %v715, 0.0
    %v734 = vsel %vm716, %v718, %v644
    %v735 = vsel %vm717, %v719, %v708
    %v736 = vsel %vm716, %v720, %v646
    %v737 = vsel %vm717, %v721, %v709
    %v738 = vsel %vm716, %v722, %v648
    %v739 = vsel %vm717, %v723, %v710
    %v740 = vsel %vm716, %v724, %v650
    %v741 = vsel %vm717, %v725, %v711
    %v742 = vsel %vm716, %v726, %v652
    %v743 = vsel %vm717, %v727, %v712
    %v744 = vsel %vm716, %v728, %v654
    %v745 = vsel %vm717, %v729, %v713
    %v746 = vsel %vm716, %v730, %v656
    %v747 = vsel %vm717, %v731, %v714
    %v748 = vsel %vm716, %v732, %v658
    %v749 = vsel %vm717, %v733, %v715
    %vm750 = vcmp.le.f32.partialorder %v644, 0.0
    %vm751 = vcmp.le.f32.partialorder %v708, 0.0
    %vm752 = vcmp.le.f32.partialorder %v646, 0.0
    %vm753 = vcmp.le.f32.partialorder %v709, 0.0
    %vm754 = vcmp.le.f32.partialorder %v648, 0.0
    %vm755 = vcmp.le.f32.partialorder %v710, 0.0
    %vm756 = vcmp.le.f32.partialorder %v650, 0.0
    %vm757 = vcmp.le.f32.partialorder %v711, 0.0
    %vm758 = vcmp.le.f32.partialorder %v652, 0.0
    %vm759 = vcmp.le.f32.partialorder %v712, 0.0
    %vm760 = vcmp.le.f32.partialorder %v654, 0.0
    %vm761 = vcmp.le.f32.partialorder %v713, 0.0
    %vm762 = vcmp.le.f32.partialorder %v656, 0.0
    %vm763 = vcmp.le.f32.partialorder %v714, 0.0
    %vm764 = vcmp.le.f32.partialorder %v658, 0.0
    %vm765 = vcmp.le.f32.partialorder %v715, 0.0
    %vm766 = vmand %vm716, %vm750
    %vm767 = vmand %vm717, %vm751
    %vm768 = vmand %vm716, %vm752
    %vm769 = vmand %vm717, %vm753
    %vm770 = vmand %vm716, %vm754
    %vm771 = vmand %vm717, %vm755
    %vm772 = vmand %vm716, %vm756
    %vm773 = vmand %vm717, %vm757
    %vm774 = vmand %vm716, %vm758
    %vm775 = vmand %vm717, %vm759
    %vm776 = vmand %vm716, %vm760
    %vm777 = vmand %vm717, %vm761
    %vm778 = vmand %vm716, %vm762
    %vm779 = vmand %vm717, %vm763
    %vm780 = vmand %vm716, %vm764
    %vm781 = vmand %vm717, %vm765
    %v782 = vsub.s32 %v67, 15
    %v783 = vsub.s32 %v68, 15
    %v784 = vsel %vm766, %v782, %v692
    %v785 = vsel %vm767, %v783, %v693
    %v786 = vsel %vm768, %v782, %v694
    %v787 = vsel %vm769, %v783, %v695
    %v788 = vsel %vm770, %v782, %v696
    %v789 = vsel %vm771, %v783, %v697
    %v790 = vsel %vm772, %v782, %v698
    %v791 = vsel %vm773, %v783, %v699
    %v792 = vsel %vm774, %v782, %v700
    %v793 = vsel %vm775, %v783, %v701
    %v794 = vsel %vm776, %v782, %v702
    %v795 = vsel %vm777, %v783, %v703
    %v796 = vsel %vm778, %v782, %v704
    %v797 = vsel %vm779, %v783, %v705
    %v798 = vsel %vm780, %v782, %v706
    %v799 = vsel %vm781, %v783, %v707
    %v800 = vmul.f32 %v660, 0.0625
    %v801 = vmul.f32 %v661, 0.0625
    %v802 = vmul.f32 %v662, 0.0625
    %v803 = vmul.f32 %v663, 0.0625
    %v804 = vmul.f32 %v664, 0.0625
    %v805 = vmul.f32 %v665, 0.0625
    %v806 = vmul.f32 %v666, 0.0625
    %v807 = vmul.f32 %v667, 0.0625
    %v808 = vmul.f32 %v668, 0.0625
    %v809 = vmul.f32 %v669, 0.0625
    %v810 = vmul.f32 %v670, 0.0625
    %v811 = vmul.f32 %v671, 0.0625
    %v812 = vmul.f32 %v672, 0.0625
    %v813 = vmul.f32 %v673, 0.0625
    %v814 = vmul.f32 %v674, 0.0625
    %v815 = vmul.f32 %v675, 0.0625
    %v816 = vmul.f32 %v660, 0.25
    %v817 = vmul.f32 %v661, 0.25
    %v818 = vmul.f32 %v662, 0.25
    %v819 = vmul.f32 %v663, 0.25
    %v820 = vmul.f32 %v664, 0.25
    %v821 = vmul.f32 %v665, 0.25
    %v822 = vmul.f32 %v666, 0.25
    %v823 = vmul.f32 %v667, 0.25
    %v824 = vmul.f32 %v668, 0.25
    %v825 = vmul.f32 %v669, 0.25
    %v826 = vmul.f32 %v670, 0.25
    %v827 = vmul.f32 %v671, 0.25
    %v828 = vmul.f32 %v672, 0.25
    %v829 = vmul.f32 %v673, 0.25
    %v830 = vmul.f32 %v674, 0.25
    %v831 = vmul.f32 %v675, 0.25
    %vm832 = vcmask 261120
    %833 = vst.msk [vmem:[#allocation6] sm:$0xff] %vm832, %v734
    %834 = vst.msk [vmem:[#allocation6 + $0x8] sm:$0xff] %vm832, %v735
    %835 = vst.msk [vmem:[#allocation6 + $0x10] sm:$0xff] %vm832, %v736
    %836 = vst.msk [vmem:[#allocation6 + $0x18] sm:$0xff] %vm832, %v737
    %837 = vst.msk [vmem:[#allocation6 + $0x20] sm:$0xff] %vm832, %v738
    %838 = vst.msk [vmem:[#allocation6 + $0x28] sm:$0xff] %vm832, %v739
    %839 = vst.msk [vmem:[#allocation6 + $0x30] sm:$0xff] %vm832, %v740
    %840 = vst.msk [vmem:[#allocation6 + $0x38] sm:$0xff] %vm832, %v741
    %841 = vst.msk [vmem:[#allocation6 + $0x40] sm:$0xff] %vm832, %v742
    %842 = vst.msk [vmem:[#allocation6 + $0x48] sm:$0xff] %vm832, %v743
    %843 = vst.msk [vmem:[#allocation6 + $0x50] sm:$0xff] %vm832, %v744
    %844 = vst.msk [vmem:[#allocation6 + $0x58] sm:$0xff] %vm832, %v745
    %845 = vst.msk [vmem:[#allocation6 + $0x60] sm:$0xff] %vm832, %v746
    %846 = vst.msk [vmem:[#allocation6 + $0x68] sm:$0xff] %vm832, %v747
    %847 = vst.msk [vmem:[#allocation6 + $0x70] sm:$0xff] %vm832, %v748
    %848 = vst.msk [vmem:[#allocation6 + $0x78] sm:$0xff] %vm832, %v749
    %849 = vst.msk [vmem:[#allocation8] sm:$0xff] %vm832, %v784
    %850 = vst.msk [vmem:[#allocation8 + $0x8] sm:$0xff] %vm832, %v785
    %851 = vst.msk [vmem:[#allocation8 + $0x10] sm:$0xff] %vm832, %v786
    %852 = vst.msk [vmem:[#allocation8 + $0x18] sm:$0xff] %vm832, %v787
    %853 = vst.msk [vmem:[#allocation8 + $0x20] sm:$0xff] %vm832, %v788
    %854 = vst.msk [vmem:[#allocation8 + $0x28] sm:$0xff] %vm832, %v789
    %855 = vst.msk [vmem:[#allocation8 + $0x30] sm:$0xff] %vm832, %v790
    %856 = vst.msk [vmem:[#allocation8 + $0x38] sm:$0xff] %vm832, %v791
    %857 = vst.msk [vmem:[#allocation8 + $0x40] sm:$0xff] %vm832, %v792
    %858 = vst.msk [vmem:[#allocation8 + $0x48] sm:$0xff] %vm832, %v793
    %859 = vst.msk [vmem:[#allocation8 + $0x50] sm:$0xff] %vm832, %v794
    %860 = vst.msk [vmem:[#allocation8 + $0x58] sm:$0xff] %vm832, %v795
    %861 = vst.msk [vmem:[#allocation8 + $0x60] sm:$0xff] %vm832, %v796
    %862 = vst.msk [vmem:[#allocation8 + $0x68] sm:$0xff] %vm832, %v797
    %863 = vst.msk [vmem:[#allocation8 + $0x70] sm:$0xff] %vm832, %v798
    %864 = vst.msk [vmem:[#allocation8 + $0x78] sm:$0xff] %vm832, %v799
    %v865 = vld [vmem:[%s1] sm:$0xff]
    %v866 = vld [vmem:[%s2] sm:$0xff]
    %v867 = vld [vmem:[%s3] sm:$0x1]
    %v869 = vperm.slane %v867, 0
    %vm871 = vcmask 64512
    %v873 = vsel %vm871, %v865, 0
    %875 = vmatpush.msra.mxu0 0.0
    %876 = vmatpush.msra.mxu0 0.0
    %877 = vmatpush.msra.mxu0 0.0
    %878 = vmatpush.msra.mxu0 0.0
    %879 = vmatpush.msra.mxu0 0.0
    %880 = vmatpush.msra.mxu0 0.0
    %881 = vmatpush.msra.mxu0 0.0
    %882 = vmatpush.msra.mxu0 0.0
    %883 = vmatpush.msra.mxu0 0.0
    %884 = vmatpush.msra.mxu0 0.0
    %885 = vmatpush.msra.mxu0 0.0
    %886 = vmatpush.msra.mxu0 0.0
    %887 = vmatpush.msra.mxu0 0.0
    %888 = vmatpush.msra.mxu0 0.0
    %889 = vmatpush.msra.mxu0 0.0
    %890 = vmatpush.msra.mxu0 %v866
    %891 = vmatmul.f32.gmra.mxu0 %v873
    %v892 = vpop.f32.mrf.mxu0
    %v893 = vadd.f32 %v869, %v892
    %894 = vdwg.mxu0
    %v895 = vmax.f32 %v893, 0.0
    %v896 = vld [vmem:[%s4] sm:$0xff]
    %v897 = vld [vmem:[%s4 + $0x8] sm:$0xff]
    %v898 = vld [vmem:[%s4 + $0x10] sm:$0xff]
    %v899 = vld [vmem:[%s4 + $0x18] sm:$0xff]
    %v900 = vld [vmem:[%s4 + $0x20] sm:$0xff]
    %v901 = vld [vmem:[%s5] sm:$0x1]
    %v903 = vperm.slane %v901, 0
    %vm905 = vcmask 326656
    %v907 = vsel %vm905, %v895, 0
    %909 = vmatpush.msra.mxu0 0.0
    %910 = vmatpush.msra.mxu0 0.0
    %911 = vmatpush.msra.mxu0 0.0
    %912 = vmatpush.msra.mxu0 0.0
    %913 = vmatpush.msra.mxu0 0.0
    %914 = vmatpush.msra.mxu0 0.0
    %915 = vmatpush.msra.mxu0 0.0
    %916 = vmatpush.msra.mxu0 0.0
    %917 = vmatpush.msra.mxu0 0.0
    %918 = vmatpush.msra.mxu0 0.0
    %919 = vmatpush.msra.mxu0 0.0
    %920 = vmatpush.msra.mxu0 %v900
    %921 = vmatpush.msra.mxu0 %v899
    %922 = vmatpush.msra.mxu0 %v898
    %923 = vmatpush.msra.mxu0 %v897
    %924 = vmatpush.msra.mxu0 %v896
    %925 = vmatmul.f32.gmra.mxu0 %v907
    %v926 = vpop.f32.mrf.mxu0
    %v927 = vadd.f32 %v903, %v926
    %928 = vdwg.mxu0
    %v929 = vmax.f32 %v927, 0.0
    %v931 = vrot.slane %v929, 1
    %v932 = vrot.slane %v929, 2
    %v933 = vrot.slane %v929, 3
    %v934 = vrot.slane %v929, 4
    %v935 = vrot.slane %v929, 5
    %v936 = vrot.slane %v929, 6
    %v937 = vrot.slane %v929, 7
    %v938 = vperm.slane %v929, 0
    %v939 = vperm.slane %v931, 0
    %v940 = vperm.slane %v932, 0
    %v941 = vperm.slane %v933, 0
    %v942 = vperm.slane %v934, 0
    %v943 = vperm.slane %v935, 0
    %v944 = vperm.slane %v936, 0
    %v945 = vperm.slane %v937, 0
    %v946 = vsel %vm832, %v734, 0.0
    %947 = vadd.xlane.f32.xlu0 %v946
    %v948 = vpop.xlane.xlu0 %947
    %v949 = vsel %vm832, %v735, 0.0
    %950 = vadd.xlane.f32.xlu0 %v949
    %v951 = vpop.xlane.xlu0 %950
    %v952 = vsel %vm832, %v736, 0.0
    %953 = vadd.xlane.f32.xlu0 %v952
    %v954 = vpop.xlane.xlu0 %953
    %v955 = vsel %vm832, %v737, 0.0
    %956 = vadd.xlane.f32.xlu0 %v955
    %v957 = vpop.xlane.xlu0 %956
    %v958 = vsel %vm832, %v738, 0.0
    %959 = vadd.xlane.f32.xlu0 %v958
    %v960 = vpop.xlane.xlu0 %959
    %v961 = vsel %vm832, %v739, 0.0
    %962 = vadd.xlane.f32.xlu0 %v961
    %v963 = vpop.xlane.xlu0 %962
    %v964 = vsel %vm832, %v740, 0.0
    %965 = vadd.xlane.f32.xlu0 %v964
    %v966 = vpop.xlane.xlu0 %965
    %v967 = vsel %vm832, %v741, 0.0
    %968 = vadd.xlane.f32.xlu0 %v967
    %v969 = vpop.xlane.xlu0 %968
    %v970 = vsel %vm832, %v742, 0.0
    %971 = vadd.xlane.f32.xlu0 %v970
    %v972 = vpop.xlane.xlu0 %971
    %v973 = vsel %vm832, %v743, 0.0
    %974 = vadd.xlane.f32.xlu0 %v973
    %v975 = vpop.xlane.xlu0 %974
    %v976 = vsel %vm832, %v744, 0.0
    %977 = vadd.xlane.f32.xlu0 %v976
    %v978 = vpop.xlane.xlu0 %977
    %v979 = vsel %vm832, %v745, 0.0
    %980 = vadd.xlane.f32.xlu0 %v979
    %v981 = vpop.xlane.xlu0 %980
    %v982 = vsel %vm832, %v746, 0.0
    %983 = vadd.xlane.f32.xlu0 %v982
    %v984 = vpop.xlane.xlu0 %983
    %v985 = vsel %vm832, %v747, 0.0
    %986 = vadd.xlane.f32.xlu0 %v985
    %v987 = vpop.xlane.xlu0 %986
    %v988 = vsel %vm832, %v748, 0.0
    %989 = vadd.xlane.f32.xlu0 %v988
    %v990 = vpop.xlane.xlu0 %989
    %v991 = vsel %vm832, %v749, 0.0
    %992 = vadd.xlane.f32.xlu0 %v991
    %v993 = vpop.xlane.xlu0 %992
    %v994 = vrcp.pop 32.0
    %v995 = vmul.f32 32.0, %v994
    %v996 = vsub.f32 1.0, %v995
    %v997 = vmul.f32 %v994, %v996
    %v998 = vadd.f32 %v994, %v997
    %vm999 = vweird.f32 %v994
    %v1000 = vsel %vm999, %v994, %v998
    %v1001 = vmul.f32 %v948, %v1000
    %v1002 = vmul.f32 %v951, %v1000
    %v1003 = vmul.f32 %v954, %v1000
    %v1004 = vmul.f32 %v957, %v1000
    %v1005 = vmul.f32 %v960, %v1000
    %v1006 = vmul.f32 %v963, %v1000
    %v1007 = vmul.f32 %v966, %v1000
    %v1008 = vmul.f32 %v969, %v1000
    %v1009 = vmul.f32 %v972, %v1000
    %v1010 = vmul.f32 %v975, %v1000
    %v1011 = vmul.f32 %v978, %v1000
    %v1012 = vmul.f32 %v981, %v1000
    %v1013 = vmul.f32 %v984, %v1000
    %v1014 = vmul.f32 %v987, %v1000
    %v1015 = vmul.f32 %v990, %v1000
    %v1016 = vmul.f32 %v993, %v1000
    %v1017 = vsub.f32 %v734, %v1001
    %v1018 = vsub.f32 %v735, %v1002
    %v1019 = vsub.f32 %v736, %v1003
    %v1020 = vsub.f32 %v737, %v1004
    %v1021 = vsub.f32 %v738, %v1005
    %v1022 = vsub.f32 %v739, %v1006
    %v1023 = vsub.f32 %v740, %v1007
    %v1024 = vsub.f32 %v741, %v1008
    %v1025 = vsub.f32 %v742, %v1009
    %v1026 = vsub.f32 %v743, %v1010
    %v1027 = vsub.f32 %v744, %v1011
    %v1028 = vsub.f32 %v745, %v1012
    %v1029 = vsub.f32 %v746, %v1013
    %v1030 = vsub.f32 %v747, %v1014
    %v1031 = vsub.f32 %v748, %v1015
    %v1032 = vsub.f32 %v749, %v1016
    %v1033 = vmul.f32 %v1017, %v1017
    %v1034 = vmul.f32 %v1018, %v1018
    %v1035 = vmul.f32 %v1019, %v1019
    %v1036 = vmul.f32 %v1020, %v1020
    %v1037 = vmul.f32 %v1021, %v1021
    %v1038 = vmul.f32 %v1022, %v1022
    %v1039 = vmul.f32 %v1023, %v1023
    %v1040 = vmul.f32 %v1024, %v1024
    %v1041 = vmul.f32 %v1025, %v1025
    %v1042 = vmul.f32 %v1026, %v1026
    %v1043 = vmul.f32 %v1027, %v1027
    %v1044 = vmul.f32 %v1028, %v1028
    %v1045 = vmul.f32 %v1029, %v1029
    %v1046 = vmul.f32 %v1030, %v1030
    %v1047 = vmul.f32 %v1031, %v1031
    %v1048 = vmul.f32 %v1032, %v1032
    %v1049 = vsel %vm832, %v1033, 0.0
    %1050 = vadd.xlane.f32.xlu0 %v1049
    %v1051 = vpop.xlane.xlu0 %1050
    %v1052 = vsel %vm832, %v1034, 0.0
    %1053 = vadd.xlane.f32.xlu0 %v1052
    %v1054 = vpop.xlane.xlu0 %1053
    %v1055 = vsel %vm832, %v1035, 0.0
    %1056 = vadd.xlane.f32.xlu0 %v1055
    %v1057 = vpop.xlane.xlu0 %1056
    %v1058 = vsel %vm832, %v1036, 0.0
    %1059 = vadd.xlane.f32.xlu0 %v1058
    %v1060 = vpop.xlane.xlu0 %1059
    %v1061 = vsel %vm832, %v1037, 0.0
    %1062 = vadd.xlane.f32.xlu0 %v1061
    %v1063 = vpop.xlane.xlu0 %1062
    %v1064 = vsel %vm832, %v1038, 0.0
    %1065 = vadd.xlane.f32.xlu0 %v1064
    %v1066 = vpop.xlane.xlu0 %1065
    %v1067 = vsel %vm832, %v1039, 0.0
    %1068 = vadd.xlane.f32.xlu0 %v1067
    %v1069 = vpop.xlane.xlu0 %1068
    %v1070 = vsel %vm832, %v1040, 0.0
    %1071 = vadd.xlane.f32.xlu0 %v1070
    %v1072 = vpop.xlane.xlu0 %1071
    %v1073 = vsel %vm832, %v1041, 0.0
    %1074 = vadd.xlane.f32.xlu0 %v1073
    %v1075 = vpop.xlane.xlu0 %1074
    %v1076 = vsel %vm832, %v1042, 0.0
    %1077 = vadd.xlane.f32.xlu0 %v1076
    %v1078 = vpop.xlane.xlu0 %1077
    %v1079 = vsel %vm832, %v1043, 0.0
    %1080 = vadd.xlane.f32.xlu0 %v1079
    %v1081 = vpop.xlane.xlu0 %1080
    %v1082 = vsel %vm832, %v1044, 0.0
    %1083 = vadd.xlane.f32.xlu0 %v1082
    %v1084 = vpop.xlane.xlu0 %1083
    %v1085 = vsel %vm832, %v1045, 0.0
    %1086 = vadd.xlane.f32.xlu0 %v1085
    %v1087 = vpop.xlane.xlu0 %1086
    %v1088 = vsel %vm832, %v1046, 0.0
    %1089 = vadd.xlane.f32.xlu0 %v1088
    %v1090 = vpop.xlane.xlu0 %1089
    %v1091 = vsel %vm832, %v1047, 0.0
    %1092 = vadd.xlane.f32.xlu0 %v1091
    %v1093 = vpop.xlane.xlu0 %1092
    %v1094 = vsel %vm832, %v1048, 0.0
    %1095 = vadd.xlane.f32.xlu0 %v1094
    %v1096 = vpop.xlane.xlu0 %1095
    %v1097 = vmul.f32 %v1051, %v1000
    %v1098 = vmul.f32 %v1054, %v1000
    %v1099 = vmul.f32 %v1057, %v1000
    %v1100 = vmul.f32 %v1060, %v1000
    %v1101 = vmul.f32 %v1063, %v1000
    %v1102 = vmul.f32 %v1066, %v1000
    %v1103 = vmul.f32 %v1069, %v1000
    %v1104 = vmul.f32 %v1072, %v1000
    %v1105 = vmul.f32 %v1075, %v1000
    %v1106 = vmul.f32 %v1078, %v1000
    %v1107 = vmul.f32 %v1081, %v1000
    %v1108 = vmul.f32 %v1084, %v1000
    %v1109 = vmul.f32 %v1087, %v1000
    %v1110 = vmul.f32 %v1090, %v1000
    %v1111 = vmul.f32 %v1093, %v1000
    %v1112 = vmul.f32 %v1096, %v1000
    %v1113 = vadd.f32 %v1097, 1e-05
    %v1114 = vadd.f32 %v1098, 1e-05
    %v1115 = vadd.f32 %v1099, 1e-05
    %v1116 = vadd.f32 %v1100, 1e-05
    %v1117 = vadd.f32 %v1101, 1e-05
    %v1118 = vadd.f32 %v1102, 1e-05
    %v1119 = vadd.f32 %v1103, 1e-05
    %v1120 = vadd.f32 %v1104, 1e-05
    %v1121 = vadd.f32 %v1105, 1e-05
    %v1122 = vadd.f32 %v1106, 1e-05
    %v1123 = vadd.f32 %v1107, 1e-05
    %v1124 = vadd.f32 %v1108, 1e-05
    %v1125 = vadd.f32 %v1109, 1e-05
    %v1126 = vadd.f32 %v1110, 1e-05
    %v1127 = vadd.f32 %v1111, 1e-05
    %v1128 = vadd.f32 %v1112, 1e-05
    %v1129 = vrsqrt.pop %v1113
    %v1130 = vmul.f32 %v1129, %v1113
    %v1131 = vmul.f32 %v1130, %v1129
    %v1132 = vmul.f32 0.5, %v1131
    %v1133 = vsub.f32 1.5, %v1132
    %v1134 = vmul.f32 %v1129, %v1133
    %vm1135 = vweird.f32 %v1113
    %vm1136 = vweird.f32 %v1129
    %vm1137 = vmor %vm1135, %vm1136
    %v1138 = vsel %vm1137, %v1129, %v1134
    %v1139 = vrsqrt.pop %v1114
    %v1140 = vmul.f32 %v1139, %v1114
    %v1141 = vmul.f32 %v1140, %v1139
    %v1142 = vmul.f32 0.5, %v1141
    %v1143 = vsub.f32 1.5, %v1142
    %v1144 = vmul.f32 %v1139, %v1143
    %vm1145 = vweird.f32 %v1114
    %vm1146 = vweird.f32 %v1139
    %vm1147 = vmor %vm1145, %vm1146
    %v1148 = vsel %vm1147, %v1139, %v1144
    %v1149 = vrsqrt.pop %v1115
    %v1150 = vmul.f32 %v1149, %v1115
    %v1151 = vmul.f32 %v1150, %v1149
    %v1152 = vmul.f32 0.5, %v1151
    %v1153 = vsub.f32 1.5, %v1152
    %v1154 = vmul.f32 %v1149, %v1153
    %vm1155 = vweird.f32 %v1115
    %vm1156 = vweird.f32 %v1149
    %vm1157 = vmor %vm1155, %vm1156
    %v1158 = vsel %vm1157, %v1149, %v1154
    %v1159 = vrsqrt.pop %v1116
    %v1160 = vmul.f32 %v1159, %v1116
    %v1161 = vmul.f32 %v1160, %v1159
    %v1162 = vmul.f32 0.5, %v1161
    %v1163 = vsub.f32 1.5, %v1162
    %v1164 = vmul.f32 %v1159, %v1163
    %vm1165 = vweird.f32 %v1116
    %vm1166 = vweird.f32 %v1159
    %vm1167 = vmor %vm1165, %vm1166
    %v1168 = vsel %vm1167, %v1159, %v1164
    %v1169 = vrsqrt.pop %v1117
    %v1170 = vmul.f32 %v1169, %v1117
    %v1171 = vmul.f32 %v1170, %v1169
    %v1172 = vmul.f32 0.5, %v1171
    %v1173 = vsub.f32 1.5, %v1172
    %v1174 = vmul.f32 %v1169, %v1173
    %vm1175 = vweird.f32 %v1117
    %vm1176 = vweird.f32 %v1169
    %vm1177 = vmor %vm1175, %vm1176
    %v1178 = vsel %vm1177, %v1169, %v1174
    %v1179 = vrsqrt.pop %v1118
    %v1180 = vmul.f32 %v1179, %v1118
    %v1181 = vmul.f32 %v1180, %v1179
    %v1182 = vmul.f32 0.5, %v1181
    %v1183 = vsub.f32 1.5, %v1182
    %v1184 = vmul.f32 %v1179, %v1183
    %vm1185 = vweird.f32 %v1118
    %vm1186 = vweird.f32 %v1179
    %vm1187 = vmor %vm1185, %vm1186
    %v1188 = vsel %vm1187, %v1179, %v1184
    %v1189 = vrsqrt.pop %v1119
    %v1190 = vmul.f32 %v1189, %v1119
    %v1191 = vmul.f32 %v1190, %v1189
    %v1192 = vmul.f32 0.5, %v1191
    %v1193 = vsub.f32 1.5, %v1192
    %v1194 = vmul.f32 %v1189, %v1193
    %vm1195 = vweird.f32 %v1119
    %vm1196 = vweird.f32 %v1189
    %vm1197 = vmor %vm1195, %vm1196
    %v1198 = vsel %vm1197, %v1189, %v1194
    %v1199 = vrsqrt.pop %v1120
    %v1200 = vmul.f32 %v1199, %v1120
    %v1201 = vmul.f32 %v1200, %v1199
    %v1202 = vmul.f32 0.5, %v1201
    %v1203 = vsub.f32 1.5, %v1202
    %v1204 = vmul.f32 %v1199, %v1203
    %vm1205 = vweird.f32 %v1120
    %vm1206 = vweird.f32 %v1199
    %vm1207 = vmor %vm1205, %vm1206
    %v1208 = vsel %vm1207, %v1199, %v1204
    %v1209 = vrsqrt.pop %v1121
    %v1210 = vmul.f32 %v1209, %v1121
    %v1211 = vmul.f32 %v1210, %v1209
    %v1212 = vmul.f32 0.5, %v1211
    %v1213 = vsub.f32 1.5, %v1212
    %v1214 = vmul.f32 %v1209, %v1213
    %vm1215 = vweird.f32 %v1121
    %vm1216 = vweird.f32 %v1209
    %vm1217 = vmor %vm1215, %vm1216
    %v1218 = vsel %vm1217, %v1209, %v1214
    %v1219 = vrsqrt.pop %v1122
    %v1220 = vmul.f32 %v1219, %v1122
    %v1221 = vmul.f32 %v1220, %v1219
    %v1222 = vmul.f32 0.5, %v1221
    %v1223 = vsub.f32 1.5, %v1222
    %v1224 = vmul.f32 %v1219, %v1223
    %vm1225 = vweird.f32 %v1122
    %vm1226 = vweird.f32 %v1219
    %vm1227 = vmor %vm1225, %vm1226
    %v1228 = vsel %vm1227, %v1219, %v1224
    %v1229 = vrsqrt.pop %v1123
    %v1230 = vmul.f32 %v1229, %v1123
    %v1231 = vmul.f32 %v1230, %v1229
    %v1232 = vmul.f32 0.5, %v1231
    %v1233 = vsub.f32 1.5, %v1232
    %v1234 = vmul.f32 %v1229, %v1233
    %vm1235 = vweird.f32 %v1123
    %vm1236 = vweird.f32 %v1229
    %vm1237 = vmor %vm1235, %vm1236
    %v1238 = vsel %vm1237, %v1229, %v1234
    %v1239 = vrsqrt.pop %v1124
    %v1240 = vmul.f32 %v1239, %v1124
    %v1241 = vmul.f32 %v1240, %v1239
    %v1242 = vmul.f32 0.5, %v1241
    %v1243 = vsub.f32 1.5, %v1242
    %v1244 = vmul.f32 %v1239, %v1243
    %vm1245 = vweird.f32 %v1124
    %vm1246 = vweird.f32 %v1239
    %vm1247 = vmor %vm1245, %vm1246
    %v1248 = vsel %vm1247, %v1239, %v1244
    %v1249 = vrsqrt.pop %v1125
    %v1250 = vmul.f32 %v1249, %v1125
    %v1251 = vmul.f32 %v1250, %v1249
    %v1252 = vmul.f32 0.5, %v1251
    %v1253 = vsub.f32 1.5, %v1252
    %v1254 = vmul.f32 %v1249, %v1253
    %vm1255 = vweird.f32 %v1125
    %vm1256 = vweird.f32 %v1249
    %vm1257 = vmor %vm1255, %vm1256
    %v1258 = vsel %vm1257, %v1249, %v1254
    %v1259 = vrsqrt.pop %v1126
    %v1260 = vmul.f32 %v1259, %v1126
    %v1261 = vmul.f32 %v1260, %v1259
    %v1262 = vmul.f32 0.5, %v1261
    %v1263 = vsub.f32 1.5, %v1262
    %v1264 = vmul.f32 %v1259, %v1263
    %vm1265 = vweird.f32 %v1126
    %vm1266 = vweird.f32 %v1259
    %vm1267 = vmor %vm1265, %vm1266
    %v1268 = vsel %vm1267, %v1259, %v1264
    %v1269 = vrsqrt.pop %v1127
    %v1270 = vmul.f32 %v1269, %v1127
    %v1271 = vmul.f32 %v1270, %v1269
    %v1272 = vmul.f32 0.5, %v1271
    %v1273 = vsub.f32 1.5, %v1272
    %v1274 = vmul.f32 %v1269, %v1273
    %vm1275 = vweird.f32 %v1127
    %vm1276 = vweird.f32 %v1269
    %vm1277 = vmor %vm1275, %vm1276
    %v1278 = vsel %vm1277, %v1269, %v1274
    %v1279 = vrsqrt.pop %v1128
    %v1280 = vmul.f32 %v1279, %v1128
    %v1281 = vmul.f32 %v1280, %v1279
    %v1282 = vmul.f32 0.5, %v1281
    %v1283 = vsub.f32 1.5, %v1282
    %v1284 = vmul.f32 %v1279, %v1283
    %vm1285 = vweird.f32 %v1128
    %vm1286 = vweird.f32 %v1279
    %vm1287 = vmor %vm1285, %vm1286
    %v1288 = vsel %vm1287, %v1279, %v1284
    %v1289 = vmul.f32 %v1017, %v1138
    %v1290 = vmul.f32 %v1018, %v1148
    %v1291 = vmul.f32 %v1019, %v1158
    %v1292 = vmul.f32 %v1020, %v1168
    %v1293 = vmul.f32 %v1021, %v1178
    %v1294 = vmul.f32 %v1022, %v1188
    %v1295 = vmul.f32 %v1023, %v1198
    %v1296 = vmul.f32 %v1024, %v1208
    %v1297 = vmul.f32 %v1025, %v1218
    %v1298 = vmul.f32 %v1026, %v1228
    %v1299 = vmul.f32 %v1027, %v1238
    %v1300 = vmul.f32 %v1028, %v1248
    %v1301 = vmul.f32 %v1029, %v1258
    %v1302 = vmul.f32 %v1030, %v1268
    %v1303 = vmul.f32 %v1031, %v1278
    %v1304 = vmul.f32 %v1032, %v1288
    %v1305 = vld [vmem:[%s6] sm:$0x1]
    %v1306 = vperm.slane %v1305, 0
    %v1307 = vmul.f32 %v1289, %v1306
    %v1308 = vmul.f32 %v1290, %v1306
    %v1309 = vmul.f32 %v1291, %v1306
    %v1310 = vmul.f32 %v1292, %v1306
    %v1311 = vmul.f32 %v1293, %v1306
    %v1312 = vmul.f32 %v1294, %v1306
    %v1313 = vmul.f32 %v1295, %v1306
    %v1314 = vmul.f32 %v1296, %v1306
    %v1315 = vmul.f32 %v1297, %v1306
    %v1316 = vmul.f32 %v1298, %v1306
    %v1317 = vmul.f32 %v1299, %v1306
    %v1318 = vmul.f32 %v1300, %v1306
    %v1319 = vmul.f32 %v1301, %v1306
    %v1320 = vmul.f32 %v1302, %v1306
    %v1321 = vmul.f32 %v1303, %v1306
    %v1322 = vmul.f32 %v1304, %v1306
    %v1323 = vld [vmem:[%s7] sm:$0x1]
    %v1324 = vperm.slane %v1323, 0
    %v1325 = vadd.f32 %v1307, %v1324
    %v1326 = vadd.f32 %v1308, %v1324
    %v1327 = vadd.f32 %v1309, %v1324
    %v1328 = vadd.f32 %v1310, %v1324
    %v1329 = vadd.f32 %v1311, %v1324
    %v1330 = vadd.f32 %v1312, %v1324
    %v1331 = vadd.f32 %v1313, %v1324
    %v1332 = vadd.f32 %v1314, %v1324
    %v1333 = vadd.f32 %v1315, %v1324
    %v1334 = vadd.f32 %v1316, %v1324
    %v1335 = vadd.f32 %v1317, %v1324
    %v1336 = vadd.f32 %v1318, %v1324
    %v1337 = vadd.f32 %v1319, %v1324
    %v1338 = vadd.f32 %v1320, %v1324
    %v1339 = vadd.f32 %v1321, %v1324
    %v1340 = vadd.f32 %v1322, %v1324
    %1341 = vst.msk [vmem:[#allocation5] sm:$0xff] %vm832, %v1325
    %1342 = vst.msk [vmem:[#allocation5 + $0x8] sm:$0xff] %vm832, %v1326
    %1343 = vst.msk [vmem:[#allocation5 + $0x10] sm:$0xff] %vm832, %v1327
    %1344 = vst.msk [vmem:[#allocation5 + $0x18] sm:$0xff] %vm832, %v1328
    %1345 = vst.msk [vmem:[#allocation5 + $0x20] sm:$0xff] %vm832, %v1329
    %1346 = vst.msk [vmem:[#allocation5 + $0x28] sm:$0xff] %vm832, %v1330
    %1347 = vst.msk [vmem:[#allocation5 + $0x30] sm:$0xff] %vm832, %v1331
    %1348 = vst.msk [vmem:[#allocation5 + $0x38] sm:$0xff] %vm832, %v1332
    %1349 = vst.msk [vmem:[#allocation5 + $0x40] sm:$0xff] %vm832, %v1333
    %1350 = vst.msk [vmem:[#allocation5 + $0x48] sm:$0xff] %vm832, %v1334
    %1351 = vst.msk [vmem:[#allocation5 + $0x50] sm:$0xff] %vm832, %v1335
    %1352 = vst.msk [vmem:[#allocation5 + $0x58] sm:$0xff] %vm832, %v1336
    %1353 = vst.msk [vmem:[#allocation5 + $0x60] sm:$0xff] %vm832, %v1337
    %1354 = vst.msk [vmem:[#allocation5 + $0x68] sm:$0xff] %vm832, %v1338
    %1355 = vst.msk [vmem:[#allocation5 + $0x70] sm:$0xff] %vm832, %v1339
    %1356 = vst.msk [vmem:[#allocation5 + $0x78] sm:$0xff] %vm832, %v1340
    %v1357 = vsel %vm832, %v800, 0.0
    %1358 = vadd.xlane.f32.xlu0 %v1357
    %v1359 = vpop.xlane.xlu0 %1358
    %v1360 = vsel %vm832, %v801, 0.0
    %1361 = vadd.xlane.f32.xlu0 %v1360
    %v1362 = vpop.xlane.xlu0 %1361
    %v1363 = vsel %vm832, %v802, 0.0
    %1364 = vadd.xlane.f32.xlu0 %v1363
    %v1365 = vpop.xlane.xlu0 %1364
    %v1366 = vsel %vm832, %v803, 0.0
    %1367 = vadd.xlane.f32.xlu0 %v1366
    %v1368 = vpop.xlane.xlu0 %1367
    %v1369 = vsel %vm832, %v804, 0.0
    %1370 = vadd.xlane.f32.xlu0 %v1369
    %v1371 = vpop.xlane.xlu0 %1370
    %v1372 = vsel %vm832, %v805, 0.0
    %1373 = vadd.xlane.f32.xlu0 %v1372
    %v1374 = vpop.xlane.xlu0 %1373
    %v1375 = vsel %vm832, %v806, 0.0
    %1376 = vadd.xlane.f32.xlu0 %v1375
    %v1377 = vpop.xlane.xlu0 %1376
    %v1378 = vsel %vm832, %v807, 0.0
    %1379 = vadd.xlane.f32.xlu0 %v1378
    %v1380 = vpop.xlane.xlu0 %1379
    %v1381 = vsel %vm832, %v808, 0.0
    %1382 = vadd.xlane.f32.xlu0 %v1381
    %v1383 = vpop.xlane.xlu0 %1382
    %v1384 = vsel %vm832, %v809, 0.0
    %1385 = vadd.xlane.f32.xlu0 %v1384
    %v1386 = vpop.xlane.xlu0 %1385
    %v1387 = vsel %vm832, %v810, 0.0
    %1388 = vadd.xlane.f32.xlu0 %v1387
    %v1389 = vpop.xlane.xlu0 %1388
    %v1390 = vsel %vm832, %v811, 0.0
    %1391 = vadd.xlane.f32.xlu0 %v1390
    %v1392 = vpop.xlane.xlu0 %1391
    %v1393 = vsel %vm832, %v812, 0.0
    %1394 = vadd.xlane.f32.xlu0 %v1393
    %v1395 = vpop.xlane.xlu0 %1394
    %v1396 = vsel %vm832, %v813, 0.0
    %1397 = vadd.xlane.f32.xlu0 %v1396
    %v1398 = vpop.xlane.xlu0 %1397
    %v1399 = vsel %vm832, %v814, 0.0
    %1400 = vadd.xlane.f32.xlu0 %v1399
    %v1401 = vpop.xlane.xlu0 %1400
    %v1402 = vsel %vm832, %v815, 0.0
    %1403 = vadd.xlane.f32.xlu0 %v1402
    %v1404 = vpop.xlane.xlu0 %1403
    %v1405 = vmul.f32 %v1359, %v1000
    %v1406 = vmul.f32 %v1362, %v1000
    %v1407 = vmul.f32 %v1365, %v1000
    %v1408 = vmul.f32 %v1368, %v1000
    %v1409 = vmul.f32 %v1371, %v1000
    %v1410 = vmul.f32 %v1374, %v1000
    %v1411 = vmul.f32 %v1377, %v1000
    %v1412 = vmul.f32 %v1380, %v1000
    %v1413 = vmul.f32 %v1383, %v1000
    %v1414 = vmul.f32 %v1386, %v1000
    %v1415 = vmul.f32 %v1389, %v1000
    %v1416 = vmul.f32 %v1392, %v1000
    %v1417 = vmul.f32 %v1395, %v1000
    %v1418 = vmul.f32 %v1398, %v1000
    %v1419 = vmul.f32 %v1401, %v1000
    %v1420 = vmul.f32 %v1404, %v1000
    %v1421 = vsub.f32 %v800, %v1405
    %v1422 = vsub.f32 %v801, %v1406
    %v1423 = vsub.f32 %v802, %v1407
    %v1424 = vsub.f32 %v803, %v1408
    %v1425 = vsub.f32 %v804, %v1409
    %v1426 = vsub.f32 %v805, %v1410
    %v1427 = vsub.f32 %v806, %v1411
    %v1428 = vsub.f32 %v807, %v1412
    %v1429 = vsub.f32 %v808, %v1413
    %v1430 = vsub.f32 %v809, %v1414
    %v1431 = vsub.f32 %v810, %v1415
    %v1432 = vsub.f32 %v811, %v1416
    %v1433 = vsub.f32 %v812, %v1417
    %v1434 = vsub.f32 %v813, %v1418
    %v1435 = vsub.f32 %v814, %v1419
    %v1436 = vsub.f32 %v815, %v1420
    %v1437 = vmul.f32 %v1421, %v1421
    %v1438 = vmul.f32 %v1422, %v1422
    %v1439 = vmul.f32 %v1423, %v1423
    %v1440 = vmul.f32 %v1424, %v1424
    %v1441 = vmul.f32 %v1425, %v1425
    %v1442 = vmul.f32 %v1426, %v1426
    %v1443 = vmul.f32 %v1427, %v1427
    %v1444 = vmul.f32 %v1428, %v1428
    %v1445 = vmul.f32 %v1429, %v1429
    %v1446 = vmul.f32 %v1430, %v1430
    %v1447 = vmul.f32 %v1431, %v1431
    %v1448 = vmul.f32 %v1432, %v1432
    %v1449 = vmul.f32 %v1433, %v1433
    %v1450 = vmul.f32 %v1434, %v1434
    %v1451 = vmul.f32 %v1435, %v1435
    %v1452 = vmul.f32 %v1436, %v1436
    %v1453 = vsel %vm832, %v1437, 0.0
    %1454 = vadd.xlane.f32.xlu0 %v1453
    %v1455 = vpop.xlane.xlu0 %1454
    %v1456 = vsel %vm832, %v1438, 0.0
    %1457 = vadd.xlane.f32.xlu0 %v1456
    %v1458 = vpop.xlane.xlu0 %1457
    %v1459 = vsel %vm832, %v1439, 0.0
    %1460 = vadd.xlane.f32.xlu0 %v1459
    %v1461 = vpop.xlane.xlu0 %1460
    %v1462 = vsel %vm832, %v1440, 0.0
    %1463 = vadd.xlane.f32.xlu0 %v1462
    %v1464 = vpop.xlane.xlu0 %1463
    %v1465 = vsel %vm832, %v1441, 0.0
    %1466 = vadd.xlane.f32.xlu0 %v1465
    %v1467 = vpop.xlane.xlu0 %1466
    %v1468 = vsel %vm832, %v1442, 0.0
    %1469 = vadd.xlane.f32.xlu0 %v1468
    %v1470 = vpop.xlane.xlu0 %1469
    %v1471 = vsel %vm832, %v1443, 0.0
    %1472 = vadd.xlane.f32.xlu0 %v1471
    %v1473 = vpop.xlane.xlu0 %1472
    %v1474 = vsel %vm832, %v1444, 0.0
    %1475 = vadd.xlane.f32.xlu0 %v1474
    %v1476 = vpop.xlane.xlu0 %1475
    %v1477 = vsel %vm832, %v1445, 0.0
    %1478 = vadd.xlane.f32.xlu0 %v1477
    %v1479 = vpop.xlane.xlu0 %1478
    %v1480 = vsel %vm832, %v1446, 0.0
    %1481 = vadd.xlane.f32.xlu0 %v1480
    %v1482 = vpop.xlane.xlu0 %1481
    %v1483 = vsel %vm832, %v1447, 0.0
    %1484 = vadd.xlane.f32.xlu0 %v1483
    %v1485 = vpop.xlane.xlu0 %1484
    %v1486 = vsel %vm832, %v1448, 0.0
    %1487 = vadd.xlane.f32.xlu0 %v1486
    %v1488 = vpop.xlane.xlu0 %1487
    %v1489 = vsel %vm832, %v1449, 0.0
    %1490 = vadd.xlane.f32.xlu0 %v1489
    %v1491 = vpop.xlane.xlu0 %1490
    %v1492 = vsel %vm832, %v1450, 0.0
    %1493 = vadd.xlane.f32.xlu0 %v1492
    %v1494 = vpop.xlane.xlu0 %1493
    %v1495 = vsel %vm832, %v1451, 0.0
    %1496 = vadd.xlane.f32.xlu0 %v1495
    %v1497 = vpop.xlane.xlu0 %1496
    %v1498 = vsel %vm832, %v1452, 0.0
    %1499 = vadd.xlane.f32.xlu0 %v1498
    %v1500 = vpop.xlane.xlu0 %1499
    %v1501 = vmul.f32 %v1455, %v1000
    %v1502 = vmul.f32 %v1458, %v1000
    %v1503 = vmul.f32 %v1461, %v1000
    %v1504 = vmul.f32 %v1464, %v1000
    %v1505 = vmul.f32 %v1467, %v1000
    %v1506 = vmul.f32 %v1470, %v1000
    %v1507 = vmul.f32 %v1473, %v1000
    %v1508 = vmul.f32 %v1476, %v1000
    %v1509 = vmul.f32 %v1479, %v1000
    %v1510 = vmul.f32 %v1482, %v1000
    %v1511 = vmul.f32 %v1485, %v1000
    %v1512 = vmul.f32 %v1488, %v1000
    %v1513 = vmul.f32 %v1491, %v1000
    %v1514 = vmul.f32 %v1494, %v1000
    %v1515 = vmul.f32 %v1497, %v1000
    %v1516 = vmul.f32 %v1500, %v1000
    %v1517 = vadd.f32 %v1501, 1e-05
    %v1518 = vadd.f32 %v1502, 1e-05
    %v1519 = vadd.f32 %v1503, 1e-05
    %v1520 = vadd.f32 %v1504, 1e-05
    %v1521 = vadd.f32 %v1505, 1e-05
    %v1522 = vadd.f32 %v1506, 1e-05
    %v1523 = vadd.f32 %v1507, 1e-05
    %v1524 = vadd.f32 %v1508, 1e-05
    %v1525 = vadd.f32 %v1509, 1e-05
    %v1526 = vadd.f32 %v1510, 1e-05
    %v1527 = vadd.f32 %v1511, 1e-05
    %v1528 = vadd.f32 %v1512, 1e-05
    %v1529 = vadd.f32 %v1513, 1e-05
    %v1530 = vadd.f32 %v1514, 1e-05
    %v1531 = vadd.f32 %v1515, 1e-05
    %v1532 = vadd.f32 %v1516, 1e-05
    %v1533 = vrsqrt.pop %v1517
    %v1534 = vmul.f32 %v1533, %v1517
    %v1535 = vmul.f32 %v1534, %v1533
    %v1536 = vmul.f32 0.5, %v1535
    %v1537 = vsub.f32 1.5, %v1536
    %v1538 = vmul.f32 %v1533, %v1537
    %vm1539 = vweird.f32 %v1517
    %vm1540 = vweird.f32 %v1533
    %vm1541 = vmor %vm1539, %vm1540
    %v1542 = vsel %vm1541, %v1533, %v1538
    %v1543 = vrsqrt.pop %v1518
    %v1544 = vmul.f32 %v1543, %v1518
    %v1545 = vmul.f32 %v1544, %v1543
    %v1546 = vmul.f32 0.5, %v1545
    %v1547 = vsub.f32 1.5, %v1546
    %v1548 = vmul.f32 %v1543, %v1547
    %vm1549 = vweird.f32 %v1518
    %vm1550 = vweird.f32 %v1543
    %vm1551 = vmor %vm1549, %vm1550
    %v1552 = vsel %vm1551, %v1543, %v1548
    %v1553 = vrsqrt.pop %v1519
    %v1554 = vmul.f32 %v1553, %v1519
    %v1555 = vmul.f32 %v1554, %v1553
    %v1556 = vmul.f32 0.5, %v1555
    %v1557 = vsub.f32 1.5, %v1556
    %v1558 = vmul.f32 %v1553, %v1557
    %vm1559 = vweird.f32 %v1519
    %vm1560 = vweird.f32 %v1553
    %vm1561 = vmor %vm1559, %vm1560
    %v1562 = vsel %vm1561, %v1553, %v1558
    %v1563 = vrsqrt.pop %v1520
    %v1564 = vmul.f32 %v1563, %v1520
    %v1565 = vmul.f32 %v1564, %v1563
    %v1566 = vmul.f32 0.5, %v1565
    %v1567 = vsub.f32 1.5, %v1566
    %v1568 = vmul.f32 %v1563, %v1567
    %vm1569 = vweird.f32 %v1520
    %vm1570 = vweird.f32 %v1563
    %vm1571 = vmor %vm1569, %vm1570
    %v1572 = vsel %vm1571, %v1563, %v1568
    %v1573 = vrsqrt.pop %v1521
    %v1574 = vmul.f32 %v1573, %v1521
    %v1575 = vmul.f32 %v1574, %v1573
    %v1576 = vmul.f32 0.5, %v1575
    %v1577 = vsub.f32 1.5, %v1576
    %v1578 = vmul.f32 %v1573, %v1577
    %vm1579 = vweird.f32 %v1521
    %vm1580 = vweird.f32 %v1573
    %vm1581 = vmor %vm1579, %vm1580
    %v1582 = vsel %vm1581, %v1573, %v1578
    %v1583 = vrsqrt.pop %v1522
    %v1584 = vmul.f32 %v1583, %v1522
    %v1585 = vmul.f32 %v1584, %v1583
    %v1586 = vmul.f32 0.5, %v1585
    %v1587 = vsub.f32 1.5, %v1586
    %v1588 = vmul.f32 %v1583, %v1587
    %vm1589 = vweird.f32 %v1522
    %vm1590 = vweird.f32 %v1583
    %vm1591 = vmor %vm1589, %vm1590
    %v1592 = vsel %vm1591, %v1583, %v1588
    %v1593 = vrsqrt.pop %v1523
    %v1594 = vmul.f32 %v1593, %v1523
    %v1595 = vmul.f32 %v1594, %v1593
    %v1596 = vmul.f32 0.5, %v1595
    %v1597 = vsub.f32 1.5, %v1596
    %v1598 = vmul.f32 %v1593, %v1597
    %vm1599 = vweird.f32 %v1523
    %vm1600 = vweird.f32 %v1593
    %vm1601 = vmor %vm1599, %vm1600
    %v1602 = vsel %vm1601, %v1593, %v1598
    %v1603 = vrsqrt.pop %v1524
    %v1604 = vmul.f32 %v1603, %v1524
    %v1605 = vmul.f32 %v1604, %v1603
    %v1606 = vmul.f32 0.5, %v1605
    %v1607 = vsub.f32 1.5, %v1606
    %v1608 = vmul.f32 %v1603, %v1607
    %vm1609 = vweird.f32 %v1524
    %vm1610 = vweird.f32 %v1603
    %vm1611 = vmor %vm1609, %vm1610
    %v1612 = vsel %vm1611, %v1603, %v1608
    %v1613 = vrsqrt.pop %v1525
    %v1614 = vmul.f32 %v1613, %v1525
    %v1615 = vmul.f32 %v1614, %v1613
    %v1616 = vmul.f32 0.5, %v1615
    %v1617 = vsub.f32 1.5, %v1616
    %v1618 = vmul.f32 %v1613, %v1617
    %vm1619 = vweird.f32 %v1525
    %vm1620 = vweird.f32 %v1613
    %vm1621 = vmor %vm1619, %vm1620
    %v1622 = vsel %vm1621, %v1613, %v1618
    %v1623 = vrsqrt.pop %v1526
    %v1624 = vmul.f32 %v1623, %v1526
    %v1625 = vmul.f32 %v1624, %v1623
    %v1626 = vmul.f32 0.5, %v1625
    %v1627 = vsub.f32 1.5, %v1626
    %v1628 = vmul.f32 %v1623, %v1627
    %vm1629 = vweird.f32 %v1526
    %vm1630 = vweird.f32 %v1623
    %vm1631 = vmor %vm1629, %vm1630
    %v1632 = vsel %vm1631, %v1623, %v1628
    %v1633 = vrsqrt.pop %v1527
    %v1634 = vmul.f32 %v1633, %v1527
    %v1635 = vmul.f32 %v1634, %v1633
    %v1636 = vmul.f32 0.5, %v1635
    %v1637 = vsub.f32 1.5, %v1636
    %v1638 = vmul.f32 %v1633, %v1637
    %vm1639 = vweird.f32 %v1527
    %vm1640 = vweird.f32 %v1633
    %vm1641 = vmor %vm1639, %vm1640
    %v1642 = vsel %vm1641, %v1633, %v1638
    %v1643 = vrsqrt.pop %v1528
    %v1644 = vmul.f32 %v1643, %v1528
    %v1645 = vmul.f32 %v1644, %v1643
    %v1646 = vmul.f32 0.5, %v1645
    %v1647 = vsub.f32 1.5, %v1646
    %v1648 = vmul.f32 %v1643, %v1647
    %vm1649 = vweird.f32 %v1528
    %vm1650 = vweird.f32 %v1643
    %vm1651 = vmor %vm1649, %vm1650
    %v1652 = vsel %vm1651, %v1643, %v1648
    %v1653 = vrsqrt.pop %v1529
    %v1654 = vmul.f32 %v1653, %v1529
    %v1655 = vmul.f32 %v1654, %v1653
    %v1656 = vmul.f32 0.5, %v1655
    %v1657 = vsub.f32 1.5, %v1656
    %v1658 = vmul.f32 %v1653, %v1657
    %vm1659 = vweird.f32 %v1529
    %vm1660 = vweird.f32 %v1653
    %vm1661 = vmor %vm1659, %vm1660
    %v1662 = vsel %vm1661, %v1653, %v1658
    %v1663 = vrsqrt.pop %v1530
    %v1664 = vmul.f32 %v1663, %v1530
    %v1665 = vmul.f32 %v1664, %v1663
    %v1666 = vmul.f32 0.5, %v1665
    %v1667 = vsub.f32 1.5, %v1666
    %v1668 = vmul.f32 %v1663, %v1667
    %vm1669 = vweird.f32 %v1530
    %vm1670 = vweird.f32 %v1663
    %vm1671 = vmor %vm1669, %vm1670
    %v1672 = vsel %vm1671, %v1663, %v1668
    %v1673 = vrsqrt.pop %v1531
    %v1674 = vmul.f32 %v1673, %v1531
    %v1675 = vmul.f32 %v1674, %v1673
    %v1676 = vmul.f32 0.5, %v1675
    %v1677 = vsub.f32 1.5, %v1676
    %v1678 = vmul.f32 %v1673, %v1677
    %vm1679 = vweird.f32 %v1531
    %vm1680 = vweird.f32 %v1673
    %vm1681 = vmor %vm1679, %vm1680
    %v1682 = vsel %vm1681, %v1673, %v1678
    %v1683 = vrsqrt.pop %v1532
    %v1684 = vmul.f32 %v1683, %v1532
    %v1685 = vmul.f32 %v1684, %v1683
    %v1686 = vmul.f32 0.5, %v1685
    %v1687 = vsub.f32 1.5, %v1686
    %v1688 = vmul.f32 %v1683, %v1687
    %vm1689 = vweird.f32 %v1532
    %vm1690 = vweird.f32 %v1683
    %vm1691 = vmor %vm1689, %vm1690
    %v1692 = vsel %vm1691, %v1683, %v1688
    %v1693 = vmul.f32 %v1421, %v1542
    %v1694 = vmul.f32 %v1422, %v1552
    %v1695 = vmul.f32 %v1423, %v1562
    %v1696 = vmul.f32 %v1424, %v1572
    %v1697 = vmul.f32 %v1425, %v1582
    %v1698 = vmul.f32 %v1426, %v1592
    %v1699 = vmul.f32 %v1427, %v1602
    %v1700 = vmul.f32 %v1428, %v1612
    %v1701 = vmul.f32 %v1429, %v1622
    %v1702 = vmul.f32 %v1430, %v1632
    %v1703 = vmul.f32 %v1431, %v1642
    %v1704 = vmul.f32 %v1432, %v1652
    %v1705 = vmul.f32 %v1433, %v1662
    %v1706 = vmul.f32 %v1434, %v1672
    %v1707 = vmul.f32 %v1435, %v1682
    %v1708 = vmul.f32 %v1436, %v1692
    %v1709 = vld [vmem:[%s6 + $0x1] sm:$0x1]
    %v1710 = vperm.slane %v1709, 0
    %v1711 = vmul.f32 %v1693, %v1710
    %v1712 = vmul.f32 %v1694, %v1710
    %v1713 = vmul.f32 %v1695, %v1710
    %v1714 = vmul.f32 %v1696, %v1710
    %v1715 = vmul.f32 %v1697, %v1710
    %v1716 = vmul.f32 %v1698, %v1710
    %v1717 = vmul.f32 %v1699, %v1710
    %v1718 = vmul.f32 %v1700, %v1710
    %v1719 = vmul.f32 %v1701, %v1710
    %v1720 = vmul.f32 %v1702, %v1710
    %v1721 = vmul.f32 %v1703, %v1710
    %v1722 = vmul.f32 %v1704, %v1710
    %v1723 = vmul.f32 %v1705, %v1710
    %v1724 = vmul.f32 %v1706, %v1710
    %v1725 = vmul.f32 %v1707, %v1710
    %v1726 = vmul.f32 %v1708, %v1710
    %v1727 = vld [vmem:[%s7 + $0x1] sm:$0x1]
    %v1728 = vperm.slane %v1727, 0
    %v1729 = vadd.f32 %v1711, %v1728
    %v1730 = vadd.f32 %v1712, %v1728
    %v1731 = vadd.f32 %v1713, %v1728
    %v1732 = vadd.f32 %v1714, %v1728
    %v1733 = vadd.f32 %v1715, %v1728
    %v1734 = vadd.f32 %v1716, %v1728
    %v1735 = vadd.f32 %v1717, %v1728
    %v1736 = vadd.f32 %v1718, %v1728
    %v1737 = vadd.f32 %v1719, %v1728
    %v1738 = vadd.f32 %v1720, %v1728
    %v1739 = vadd.f32 %v1721, %v1728
    %v1740 = vadd.f32 %v1722, %v1728
    %v1741 = vadd.f32 %v1723, %v1728
    %v1742 = vadd.f32 %v1724, %v1728
    %v1743 = vadd.f32 %v1725, %v1728
    %v1744 = vadd.f32 %v1726, %v1728
    %1761 = vrot.lane.b32.xlu0 %v1729, 32
    %v1762 = vpop.permute.xlu0 %1761
    %1763 = vrot.lane.b32.xlu0 %v1730, 32
    %v1764 = vpop.permute.xlu0 %1763
    %1765 = vrot.lane.b32.xlu0 %v1731, 32
    %v1766 = vpop.permute.xlu0 %1765
    %1767 = vrot.lane.b32.xlu0 %v1732, 32
    %v1768 = vpop.permute.xlu0 %1767
    %1769 = vrot.lane.b32.xlu0 %v1733, 32
    %v1770 = vpop.permute.xlu0 %1769
    %1771 = vrot.lane.b32.xlu0 %v1734, 32
    %v1772 = vpop.permute.xlu0 %1771
    %1773 = vrot.lane.b32.xlu0 %v1735, 32
    %v1774 = vpop.permute.xlu0 %1773
    %1775 = vrot.lane.b32.xlu0 %v1736, 32
    %v1776 = vpop.permute.xlu0 %1775
    %1777 = vrot.lane.b32.xlu0 %v1737, 32
    %v1778 = vpop.permute.xlu0 %1777
    %1779 = vrot.lane.b32.xlu0 %v1738, 32
    %v1780 = vpop.permute.xlu0 %1779
    %1781 = vrot.lane.b32.xlu0 %v1739, 32
    %v1782 = vpop.permute.xlu0 %1781
    %1783 = vrot.lane.b32.xlu0 %v1740, 32
    %v1784 = vpop.permute.xlu0 %1783
    %1785 = vrot.lane.b32.xlu0 %v1741, 32
    %v1786 = vpop.permute.xlu0 %1785
    %1787 = vrot.lane.b32.xlu0 %v1742, 32
    %v1788 = vpop.permute.xlu0 %1787
    %1789 = vrot.lane.b32.xlu0 %v1743, 32
    %v1790 = vpop.permute.xlu0 %1789
    %1791 = vrot.lane.b32.xlu0 %v1744, 32
    %v1792 = vpop.permute.xlu0 %1791
    %vm1809 = vcmask 523520
    %1810 = vst.msk [vmem:[#allocation5] sm:$0xff] %vm1809, %v1762
    %1811 = vst.msk [vmem:[#allocation5 + $0x8] sm:$0xff] %vm1809, %v1764
    %1812 = vst.msk [vmem:[#allocation5 + $0x10] sm:$0xff] %vm1809, %v1766
    %1813 = vst.msk [vmem:[#allocation5 + $0x18] sm:$0xff] %vm1809, %v1768
    %1814 = vst.msk [vmem:[#allocation5 + $0x20] sm:$0xff] %vm1809, %v1770
    %1815 = vst.msk [vmem:[#allocation5 + $0x28] sm:$0xff] %vm1809, %v1772
    %1816 = vst.msk [vmem:[#allocation5 + $0x30] sm:$0xff] %vm1809, %v1774
    %1817 = vst.msk [vmem:[#allocation5 + $0x38] sm:$0xff] %vm1809, %v1776
    %1818 = vst.msk [vmem:[#allocation5 + $0x40] sm:$0xff] %vm1809, %v1778
    %1819 = vst.msk [vmem:[#allocation5 + $0x48] sm:$0xff] %vm1809, %v1780
    %1820 = vst.msk [vmem:[#allocation5 + $0x50] sm:$0xff] %vm1809, %v1782
    %1821 = vst.msk [vmem:[#allocation5 + $0x58] sm:$0xff] %vm1809, %v1784
    %1822 = vst.msk [vmem:[#allocation5 + $0x60] sm:$0xff] %vm1809, %v1786
    %1823 = vst.msk [vmem:[#allocation5 + $0x68] sm:$0xff] %vm1809, %v1788
    %1824 = vst.msk [vmem:[#allocation5 + $0x70] sm:$0xff] %vm1809, %v1790
    %1825 = vst.msk [vmem:[#allocation5 + $0x78] sm:$0xff] %vm1809, %v1792
    %v1826 = vsel %vm832, %v816, 0.0
    %1827 = vadd.xlane.f32.xlu0 %v1826
    %v1828 = vpop.xlane.xlu0 %1827
    %v1829 = vsel %vm832, %v817, 0.0
    %1830 = vadd.xlane.f32.xlu0 %v1829
    %v1831 = vpop.xlane.xlu0 %1830
    %v1832 = vsel %vm832, %v818, 0.0
    %1833 = vadd.xlane.f32.xlu0 %v1832
    %v1834 = vpop.xlane.xlu0 %1833
    %v1835 = vsel %vm832, %v819, 0.0
    %1836 = vadd.xlane.f32.xlu0 %v1835
    %v1837 = vpop.xlane.xlu0 %1836
    %v1838 = vsel %vm832, %v820, 0.0
    %1839 = vadd.xlane.f32.xlu0 %v1838
    %v1840 = vpop.xlane.xlu0 %1839
    %v1841 = vsel %vm832, %v821, 0.0
    %1842 = vadd.xlane.f32.xlu0 %v1841
    %v1843 = vpop.xlane.xlu0 %1842
    %v1844 = vsel %vm832, %v822, 0.0
    %1845 = vadd.xlane.f32.xlu0 %v1844
    %v1846 = vpop.xlane.xlu0 %1845
    %v1847 = vsel %vm832, %v823, 0.0
    %1848 = vadd.xlane.f32.xlu0 %v1847
    %v1849 = vpop.xlane.xlu0 %1848
    %v1850 = vsel %vm832, %v824, 0.0
    %1851 = vadd.xlane.f32.xlu0 %v1850
    %v1852 = vpop.xlane.xlu0 %1851
    %v1853 = vsel %vm832, %v825, 0.0
    %1854 = vadd.xlane.f32.xlu0 %v1853
    %v1855 = vpop.xlane.xlu0 %1854
    %v1856 = vsel %vm832, %v826, 0.0
    %1857 = vadd.xlane.f32.xlu0 %v1856
    %v1858 = vpop.xlane.xlu0 %1857
    %v1859 = vsel %vm832, %v827, 0.0
    %1860 = vadd.xlane.f32.xlu0 %v1859
    %v1861 = vpop.xlane.xlu0 %1860
    %v1862 = vsel %vm832, %v828, 0.0
    %1863 = vadd.xlane.f32.xlu0 %v1862
    %v1864 = vpop.xlane.xlu0 %1863
    %v1865 = vsel %vm832, %v829, 0.0
    %1866 = vadd.xlane.f32.xlu0 %v1865
    %v1867 = vpop.xlane.xlu0 %1866
    %v1868 = vsel %vm832, %v830, 0.0
    %1869 = vadd.xlane.f32.xlu0 %v1868
    %v1870 = vpop.xlane.xlu0 %1869
    %v1871 = vsel %vm832, %v831, 0.0
    %1872 = vadd.xlane.f32.xlu0 %v1871
    %v1873 = vpop.xlane.xlu0 %1872
    %v1874 = vmul.f32 %v1828, %v1000
    %v1875 = vmul.f32 %v1831, %v1000
    %v1876 = vmul.f32 %v1834, %v1000
    %v1877 = vmul.f32 %v1837, %v1000
    %v1878 = vmul.f32 %v1840, %v1000
    %v1879 = vmul.f32 %v1843, %v1000
    %v1880 = vmul.f32 %v1846, %v1000
    %v1881 = vmul.f32 %v1849, %v1000
    %v1882 = vmul.f32 %v1852, %v1000
    %v1883 = vmul.f32 %v1855, %v1000
    %v1884 = vmul.f32 %v1858, %v1000
    %v1885 = vmul.f32 %v1861, %v1000
    %v1886 = vmul.f32 %v1864, %v1000
    %v1887 = vmul.f32 %v1867, %v1000
    %v1888 = vmul.f32 %v1870, %v1000
    %v1889 = vmul.f32 %v1873, %v1000
    %v1890 = vsub.f32 %v816, %v1874
    %v1891 = vsub.f32 %v817, %v1875
    %v1892 = vsub.f32 %v818, %v1876
    %v1893 = vsub.f32 %v819, %v1877
    %v1894 = vsub.f32 %v820, %v1878
    %v1895 = vsub.f32 %v821, %v1879
    %v1896 = vsub.f32 %v822, %v1880
    %v1897 = vsub.f32 %v823, %v1881
    %v1898 = vsub.f32 %v824, %v1882
    %v1899 = vsub.f32 %v825, %v1883
    %v1900 = vsub.f32 %v826, %v1884
    %v1901 = vsub.f32 %v827, %v1885
    %v1902 = vsub.f32 %v828, %v1886
    %v1903 = vsub.f32 %v829, %v1887
    %v1904 = vsub.f32 %v830, %v1888
    %v1905 = vsub.f32 %v831, %v1889
    %v1906 = vmul.f32 %v1890, %v1890
    %v1907 = vmul.f32 %v1891, %v1891
    %v1908 = vmul.f32 %v1892, %v1892
    %v1909 = vmul.f32 %v1893, %v1893
    %v1910 = vmul.f32 %v1894, %v1894
    %v1911 = vmul.f32 %v1895, %v1895
    %v1912 = vmul.f32 %v1896, %v1896
    %v1913 = vmul.f32 %v1897, %v1897
    %v1914 = vmul.f32 %v1898, %v1898
    %v1915 = vmul.f32 %v1899, %v1899
    %v1916 = vmul.f32 %v1900, %v1900
    %v1917 = vmul.f32 %v1901, %v1901
    %v1918 = vmul.f32 %v1902, %v1902
    %v1919 = vmul.f32 %v1903, %v1903
    %v1920 = vmul.f32 %v1904, %v1904
    %v1921 = vmul.f32 %v1905, %v1905
    %v1922 = vsel %vm832, %v1906, 0.0
    %1923 = vadd.xlane.f32.xlu0 %v1922
    %v1924 = vpop.xlane.xlu0 %1923
    %v1925 = vsel %vm832, %v1907, 0.0
    %1926 = vadd.xlane.f32.xlu0 %v1925
    %v1927 = vpop.xlane.xlu0 %1926
    %v1928 = vsel %vm832, %v1908, 0.0
    %1929 = vadd.xlane.f32.xlu0 %v1928
    %v1930 = vpop.xlane.xlu0 %1929
    %v1931 = vsel %vm832, %v1909, 0.0
    %1932 = vadd.xlane.f32.xlu0 %v1931
    %v1933 = vpop.xlane.xlu0 %1932
    %v1934 = vsel %vm832, %v1910, 0.0
    %1935 = vadd.xlane.f32.xlu0 %v1934
    %v1936 = vpop.xlane.xlu0 %1935
    %v1937 = vsel %vm832, %v1911, 0.0
    %1938 = vadd.xlane.f32.xlu0 %v1937
    %v1939 = vpop.xlane.xlu0 %1938
    %v1940 = vsel %vm832, %v1912, 0.0
    %1941 = vadd.xlane.f32.xlu0 %v1940
    %v1942 = vpop.xlane.xlu0 %1941
    %v1943 = vsel %vm832, %v1913, 0.0
    %1944 = vadd.xlane.f32.xlu0 %v1943
    %v1945 = vpop.xlane.xlu0 %1944
    %v1946 = vsel %vm832, %v1914, 0.0
    %1947 = vadd.xlane.f32.xlu0 %v1946
    %v1948 = vpop.xlane.xlu0 %1947
    %v1949 = vsel %vm832, %v1915, 0.0
    %1950 = vadd.xlane.f32.xlu0 %v1949
    %v1951 = vpop.xlane.xlu0 %1950
    %v1952 = vsel %vm832, %v1916, 0.0
    %1953 = vadd.xlane.f32.xlu0 %v1952
    %v1954 = vpop.xlane.xlu0 %1953
    %v1955 = vsel %vm832, %v1917, 0.0
    %1956 = vadd.xlane.f32.xlu0 %v1955
    %v1957 = vpop.xlane.xlu0 %1956
    %v1958 = vsel %vm832, %v1918, 0.0
    %1959 = vadd.xlane.f32.xlu0 %v1958
    %v1960 = vpop.xlane.xlu0 %1959
    %v1961 = vsel %vm832, %v1919, 0.0
    %1962 = vadd.xlane.f32.xlu0 %v1961
    %v1963 = vpop.xlane.xlu0 %1962
    %v1964 = vsel %vm832, %v1920, 0.0
    %1965 = vadd.xlane.f32.xlu0 %v1964
    %v1966 = vpop.xlane.xlu0 %1965
    %v1967 = vsel %vm832, %v1921, 0.0
    %1968 = vadd.xlane.f32.xlu0 %v1967
    %v1969 = vpop.xlane.xlu0 %1968
    %v1970 = vmul.f32 %v1924, %v1000
    %v1971 = vmul.f32 %v1927, %v1000
    %v1972 = vmul.f32 %v1930, %v1000
    %v1973 = vmul.f32 %v1933, %v1000
    %v1974 = vmul.f32 %v1936, %v1000
    %v1975 = vmul.f32 %v1939, %v1000
    %v1976 = vmul.f32 %v1942, %v1000
    %v1977 = vmul.f32 %v1945, %v1000
    %v1978 = vmul.f32 %v1948, %v1000
    %v1979 = vmul.f32 %v1951, %v1000
    %v1980 = vmul.f32 %v1954, %v1000
    %v1981 = vmul.f32 %v1957, %v1000
    %v1982 = vmul.f32 %v1960, %v1000
    %v1983 = vmul.f32 %v1963, %v1000
    %v1984 = vmul.f32 %v1966, %v1000
    %v1985 = vmul.f32 %v1969, %v1000
    %v1986 = vadd.f32 %v1970, 1e-05
    %v1987 = vadd.f32 %v1971, 1e-05
    %v1988 = vadd.f32 %v1972, 1e-05
    %v1989 = vadd.f32 %v1973, 1e-05
    %v1990 = vadd.f32 %v1974, 1e-05
    %v1991 = vadd.f32 %v1975, 1e-05
    %v1992 = vadd.f32 %v1976, 1e-05
    %v1993 = vadd.f32 %v1977, 1e-05
    %v1994 = vadd.f32 %v1978, 1e-05
    %v1995 = vadd.f32 %v1979, 1e-05
    %v1996 = vadd.f32 %v1980, 1e-05
    %v1997 = vadd.f32 %v1981, 1e-05
    %v1998 = vadd.f32 %v1982, 1e-05
    %v1999 = vadd.f32 %v1983, 1e-05
    %v2000 = vadd.f32 %v1984, 1e-05
    %v2001 = vadd.f32 %v1985, 1e-05
    %v2002 = vrsqrt.pop %v1986
    %v2003 = vmul.f32 %v2002, %v1986
    %v2004 = vmul.f32 %v2003, %v2002
    %v2005 = vmul.f32 0.5, %v2004
    %v2006 = vsub.f32 1.5, %v2005
    %v2007 = vmul.f32 %v2002, %v2006
    %vm2008 = vweird.f32 %v1986
    %vm2009 = vweird.f32 %v2002
    %vm2010 = vmor %vm2008, %vm2009
    %v2011 = vsel %vm2010, %v2002, %v2007
    %v2012 = vrsqrt.pop %v1987
    %v2013 = vmul.f32 %v2012, %v1987
    %v2014 = vmul.f32 %v2013, %v2012
    %v2015 = vmul.f32 0.5, %v2014
    %v2016 = vsub.f32 1.5, %v2015
    %v2017 = vmul.f32 %v2012, %v2016
    %vm2018 = vweird.f32 %v1987
    %vm2019 = vweird.f32 %v2012
    %vm2020 = vmor %vm2018, %vm2019
    %v2021 = vsel %vm2020, %v2012, %v2017
    %v2022 = vrsqrt.pop %v1988
    %v2023 = vmul.f32 %v2022, %v1988
    %v2024 = vmul.f32 %v2023, %v2022
    %v2025 = vmul.f32 0.5, %v2024
    %v2026 = vsub.f32 1.5, %v2025
    %v2027 = vmul.f32 %v2022, %v2026
    %vm2028 = vweird.f32 %v1988
    %vm2029 = vweird.f32 %v2022
    %vm2030 = vmor %vm2028, %vm2029
    %v2031 = vsel %vm2030, %v2022, %v2027
    %v2032 = vrsqrt.pop %v1989
    %v2033 = vmul.f32 %v2032, %v1989
    %v2034 = vmul.f32 %v2033, %v2032
    %v2035 = vmul.f32 0.5, %v2034
    %v2036 = vsub.f32 1.5, %v2035
    %v2037 = vmul.f32 %v2032, %v2036
    %vm2038 = vweird.f32 %v1989
    %vm2039 = vweird.f32 %v2032
    %vm2040 = vmor %vm2038, %vm2039
    %v2041 = vsel %vm2040, %v2032, %v2037
    %v2042 = vrsqrt.pop %v1990
    %v2043 = vmul.f32 %v2042, %v1990
    %v2044 = vmul.f32 %v2043, %v2042
    %v2045 = vmul.f32 0.5, %v2044
    %v2046 = vsub.f32 1.5, %v2045
    %v2047 = vmul.f32 %v2042, %v2046
    %vm2048 = vweird.f32 %v1990
    %vm2049 = vweird.f32 %v2042
    %vm2050 = vmor %vm2048, %vm2049
    %v2051 = vsel %vm2050, %v2042, %v2047
    %v2052 = vrsqrt.pop %v1991
    %v2053 = vmul.f32 %v2052, %v1991
    %v2054 = vmul.f32 %v2053, %v2052
    %v2055 = vmul.f32 0.5, %v2054
    %v2056 = vsub.f32 1.5, %v2055
    %v2057 = vmul.f32 %v2052, %v2056
    %vm2058 = vweird.f32 %v1991
    %vm2059 = vweird.f32 %v2052
    %vm2060 = vmor %vm2058, %vm2059
    %v2061 = vsel %vm2060, %v2052, %v2057
    %v2062 = vrsqrt.pop %v1992
    %v2063 = vmul.f32 %v2062, %v1992
    %v2064 = vmul.f32 %v2063, %v2062
    %v2065 = vmul.f32 0.5, %v2064
    %v2066 = vsub.f32 1.5, %v2065
    %v2067 = vmul.f32 %v2062, %v2066
    %vm2068 = vweird.f32 %v1992
    %vm2069 = vweird.f32 %v2062
    %vm2070 = vmor %vm2068, %vm2069
    %v2071 = vsel %vm2070, %v2062, %v2067
    %v2072 = vrsqrt.pop %v1993
    %v2073 = vmul.f32 %v2072, %v1993
    %v2074 = vmul.f32 %v2073, %v2072
    %v2075 = vmul.f32 0.5, %v2074
    %v2076 = vsub.f32 1.5, %v2075
    %v2077 = vmul.f32 %v2072, %v2076
    %vm2078 = vweird.f32 %v1993
    %vm2079 = vweird.f32 %v2072
    %vm2080 = vmor %vm2078, %vm2079
    %v2081 = vsel %vm2080, %v2072, %v2077
    %v2082 = vrsqrt.pop %v1994
    %v2083 = vmul.f32 %v2082, %v1994
    %v2084 = vmul.f32 %v2083, %v2082
    %v2085 = vmul.f32 0.5, %v2084
    %v2086 = vsub.f32 1.5, %v2085
    %v2087 = vmul.f32 %v2082, %v2086
    %vm2088 = vweird.f32 %v1994
    %vm2089 = vweird.f32 %v2082
    %vm2090 = vmor %vm2088, %vm2089
    %v2091 = vsel %vm2090, %v2082, %v2087
    %v2092 = vrsqrt.pop %v1995
    %v2093 = vmul.f32 %v2092, %v1995
    %v2094 = vmul.f32 %v2093, %v2092
    %v2095 = vmul.f32 0.5, %v2094
    %v2096 = vsub.f32 1.5, %v2095
    %v2097 = vmul.f32 %v2092, %v2096
    %vm2098 = vweird.f32 %v1995
    %vm2099 = vweird.f32 %v2092
    %vm2100 = vmor %vm2098, %vm2099
    %v2101 = vsel %vm2100, %v2092, %v2097
    %v2102 = vrsqrt.pop %v1996
    %v2103 = vmul.f32 %v2102, %v1996
    %v2104 = vmul.f32 %v2103, %v2102
    %v2105 = vmul.f32 0.5, %v2104
    %v2106 = vsub.f32 1.5, %v2105
    %v2107 = vmul.f32 %v2102, %v2106
    %vm2108 = vweird.f32 %v1996
    %vm2109 = vweird.f32 %v2102
    %vm2110 = vmor %vm2108, %vm2109
    %v2111 = vsel %vm2110, %v2102, %v2107
    %v2112 = vrsqrt.pop %v1997
    %v2113 = vmul.f32 %v2112, %v1997
    %v2114 = vmul.f32 %v2113, %v2112
    %v2115 = vmul.f32 0.5, %v2114
    %v2116 = vsub.f32 1.5, %v2115
    %v2117 = vmul.f32 %v2112, %v2116
    %vm2118 = vweird.f32 %v1997
    %vm2119 = vweird.f32 %v2112
    %vm2120 = vmor %vm2118, %vm2119
    %v2121 = vsel %vm2120, %v2112, %v2117
    %v2122 = vrsqrt.pop %v1998
    %v2123 = vmul.f32 %v2122, %v1998
    %v2124 = vmul.f32 %v2123, %v2122
    %v2125 = vmul.f32 0.5, %v2124
    %v2126 = vsub.f32 1.5, %v2125
    %v2127 = vmul.f32 %v2122, %v2126
    %vm2128 = vweird.f32 %v1998
    %vm2129 = vweird.f32 %v2122
    %vm2130 = vmor %vm2128, %vm2129
    %v2131 = vsel %vm2130, %v2122, %v2127
    %v2132 = vrsqrt.pop %v1999
    %v2133 = vmul.f32 %v2132, %v1999
    %v2134 = vmul.f32 %v2133, %v2132
    %v2135 = vmul.f32 0.5, %v2134
    %v2136 = vsub.f32 1.5, %v2135
    %v2137 = vmul.f32 %v2132, %v2136
    %vm2138 = vweird.f32 %v1999
    %vm2139 = vweird.f32 %v2132
    %vm2140 = vmor %vm2138, %vm2139
    %v2141 = vsel %vm2140, %v2132, %v2137
    %v2142 = vrsqrt.pop %v2000
    %v2143 = vmul.f32 %v2142, %v2000
    %v2144 = vmul.f32 %v2143, %v2142
    %v2145 = vmul.f32 0.5, %v2144
    %v2146 = vsub.f32 1.5, %v2145
    %v2147 = vmul.f32 %v2142, %v2146
    %vm2148 = vweird.f32 %v2000
    %vm2149 = vweird.f32 %v2142
    %vm2150 = vmor %vm2148, %vm2149
    %v2151 = vsel %vm2150, %v2142, %v2147
    %v2152 = vrsqrt.pop %v2001
    %v2153 = vmul.f32 %v2152, %v2001
    %v2154 = vmul.f32 %v2153, %v2152
    %v2155 = vmul.f32 0.5, %v2154
    %v2156 = vsub.f32 1.5, %v2155
    %v2157 = vmul.f32 %v2152, %v2156
    %vm2158 = vweird.f32 %v2001
    %vm2159 = vweird.f32 %v2152
    %vm2160 = vmor %vm2158, %vm2159
    %v2161 = vsel %vm2160, %v2152, %v2157
    %v2162 = vmul.f32 %v1890, %v2011
    %v2163 = vmul.f32 %v1891, %v2021
    %v2164 = vmul.f32 %v1892, %v2031
    %v2165 = vmul.f32 %v1893, %v2041
    %v2166 = vmul.f32 %v1894, %v2051
    %v2167 = vmul.f32 %v1895, %v2061
    %v2168 = vmul.f32 %v1896, %v2071
    %v2169 = vmul.f32 %v1897, %v2081
    %v2170 = vmul.f32 %v1898, %v2091
    %v2171 = vmul.f32 %v1899, %v2101
    %v2172 = vmul.f32 %v1900, %v2111
    %v2173 = vmul.f32 %v1901, %v2121
    %v2174 = vmul.f32 %v1902, %v2131
    %v2175 = vmul.f32 %v1903, %v2141
    %v2176 = vmul.f32 %v1904, %v2151
    %v2177 = vmul.f32 %v1905, %v2161
    %v2178 = vld [vmem:[%s6 + $0x2] sm:$0x1]
    %v2179 = vperm.slane %v2178, 0
    %v2180 = vmul.f32 %v2162, %v2179
    %v2181 = vmul.f32 %v2163, %v2179
    %v2182 = vmul.f32 %v2164, %v2179
    %v2183 = vmul.f32 %v2165, %v2179
    %v2184 = vmul.f32 %v2166, %v2179
    %v2185 = vmul.f32 %v2167, %v2179
    %v2186 = vmul.f32 %v2168, %v2179
    %v2187 = vmul.f32 %v2169, %v2179
    %v2188 = vmul.f32 %v2170, %v2179
    %v2189 = vmul.f32 %v2171, %v2179
    %v2190 = vmul.f32 %v2172, %v2179
    %v2191 = vmul.f32 %v2173, %v2179
    %v2192 = vmul.f32 %v2174, %v2179
    %v2193 = vmul.f32 %v2175, %v2179
    %v2194 = vmul.f32 %v2176, %v2179
    %v2195 = vmul.f32 %v2177, %v2179
    %v2196 = vld [vmem:[%s7 + $0x2] sm:$0x1]
    %v2197 = vperm.slane %v2196, 0
    %v2198 = vadd.f32 %v2180, %v2197
    %v2199 = vadd.f32 %v2181, %v2197
    %v2200 = vadd.f32 %v2182, %v2197
    %v2201 = vadd.f32 %v2183, %v2197
    %v2202 = vadd.f32 %v2184, %v2197
    %v2203 = vadd.f32 %v2185, %v2197
    %v2204 = vadd.f32 %v2186, %v2197
    %v2205 = vadd.f32 %v2187, %v2197
    %v2206 = vadd.f32 %v2188, %v2197
    %v2207 = vadd.f32 %v2189, %v2197
    %v2208 = vadd.f32 %v2190, %v2197
    %v2209 = vadd.f32 %v2191, %v2197
    %v2210 = vadd.f32 %v2192, %v2197
    %v2211 = vadd.f32 %v2193, %v2197
    %v2212 = vadd.f32 %v2194, %v2197
    %v2213 = vadd.f32 %v2195, %v2197
    %2230 = vrot.lane.b32.xlu0 %v2198, 64
    %v2231 = vpop.permute.xlu0 %2230
    %2232 = vrot.lane.b32.xlu0 %v2199, 64
    %v2233 = vpop.permute.xlu0 %2232
    %2234 = vrot.lane.b32.xlu0 %v2200, 64
    %v2235 = vpop.permute.xlu0 %2234
    %2236 = vrot.lane.b32.xlu0 %v2201, 64
    %v2237 = vpop.permute.xlu0 %2236
    %2238 = vrot.lane.b32.xlu0 %v2202, 64
    %v2239 = vpop.permute.xlu0 %2238
    %2240 = vrot.lane.b32.xlu0 %v2203, 64
    %v2241 = vpop.permute.xlu0 %2240
    %2242 = vrot.lane.b32.xlu0 %v2204, 64
    %v2243 = vpop.permute.xlu0 %2242
    %2244 = vrot.lane.b32.xlu0 %v2205, 64
    %v2245 = vpop.permute.xlu0 %2244
    %2246 = vrot.lane.b32.xlu0 %v2206, 64
    %v2247 = vpop.permute.xlu0 %2246
    %2248 = vrot.lane.b32.xlu0 %v2207, 64
    %v2249 = vpop.permute.xlu0 %2248
    %2250 = vrot.lane.b32.xlu0 %v2208, 64
    %v2251 = vpop.permute.xlu0 %2250
    %2252 = vrot.lane.b32.xlu0 %v2209, 64
    %v2253 = vpop.permute.xlu0 %2252
    %2254 = vrot.lane.b32.xlu0 %v2210, 64
    %v2255 = vpop.permute.xlu0 %2254
    %2256 = vrot.lane.b32.xlu0 %v2211, 64
    %v2257 = vpop.permute.xlu0 %2256
    %2258 = vrot.lane.b32.xlu0 %v2212, 64
    %v2259 = vpop.permute.xlu0 %2258
    %2260 = vrot.lane.b32.xlu0 %v2213, 64
    %v2261 = vpop.permute.xlu0 %2260
    %vm2278 = vcmask 785920
    %2279 = vst.msk [vmem:[#allocation5] sm:$0xff] %vm2278, %v2231
    %2280 = vst.msk [vmem:[#allocation5 + $0x8] sm:$0xff] %vm2278, %v2233
    %2281 = vst.msk [vmem:[#allocation5 + $0x10] sm:$0xff] %vm2278, %v2235
    %2282 = vst.msk [vmem:[#allocation5 + $0x18] sm:$0xff] %vm2278, %v2237
    %2283 = vst.msk [vmem:[#allocation5 + $0x20] sm:$0xff] %vm2278, %v2239
    %2284 = vst.msk [vmem:[#allocation5 + $0x28] sm:$0xff] %vm2278, %v2241
    %2285 = vst.msk [vmem:[#allocation5 + $0x30] sm:$0xff] %vm2278, %v2243
    %2286 = vst.msk [vmem:[#allocation5 + $0x38] sm:$0xff] %vm2278, %v2245
    %2287 = vst.msk [vmem:[#allocation5 + $0x40] sm:$0xff] %vm2278, %v2247
    %2288 = vst.msk [vmem:[#allocation5 + $0x48] sm:$0xff] %vm2278, %v2249
    %2289 = vst.msk [vmem:[#allocation5 + $0x50] sm:$0xff] %vm2278, %v2251
    %2290 = vst.msk [vmem:[#allocation5 + $0x58] sm:$0xff] %vm2278, %v2253
    %2291 = vst.msk [vmem:[#allocation5 + $0x60] sm:$0xff] %vm2278, %v2255
    %2292 = vst.msk [vmem:[#allocation5 + $0x68] sm:$0xff] %vm2278, %v2257
    %2293 = vst.msk [vmem:[#allocation5 + $0x70] sm:$0xff] %vm2278, %v2259
    %2294 = vst.msk [vmem:[#allocation5 + $0x78] sm:$0xff] %vm2278, %v2261
    %2295 = vrot.lane.b32.xlu0 %v938, 96
    %v2296 = vpop.permute.xlu0 %2295
    %2297 = vrot.lane.b32.xlu0 %v939, 96
    %v2298 = vpop.permute.xlu0 %2297
    %2299 = vrot.lane.b32.xlu0 %v940, 96
    %v2300 = vpop.permute.xlu0 %2299
    %2301 = vrot.lane.b32.xlu0 %v941, 96
    %v2302 = vpop.permute.xlu0 %2301
    %2303 = vrot.lane.b32.xlu0 %v942, 96
    %v2304 = vpop.permute.xlu0 %2303
    %2305 = vrot.lane.b32.xlu0 %v943, 96
    %v2306 = vpop.permute.xlu0 %2305
    %2307 = vrot.lane.b32.xlu0 %v944, 96
    %v2308 = vpop.permute.xlu0 %2307
    %2309 = vrot.lane.b32.xlu0 %v945, 96
    %v2310 = vpop.permute.xlu0 %2309
    %vm2319 = vcmask 950016
    %2320 = vst.msk [vmem:[#allocation5] sm:$0xff] %vm2319, %v2296
    %2321 = vst.msk [vmem:[#allocation5 + $0x8] sm:$0xff] %vm2319, %v2296
    %2322 = vst.msk [vmem:[#allocation5 + $0x10] sm:$0xff] %vm2319, %v2298
    %2323 = vst.msk [vmem:[#allocation5 + $0x18] sm:$0xff] %vm2319, %v2298
    %2324 = vst.msk [vmem:[#allocation5 + $0x20] sm:$0xff] %vm2319, %v2300
    %2325 = vst.msk [vmem:[#allocation5 + $0x28] sm:$0xff] %vm2319, %v2300
    %2326 = vst.msk [vmem:[#allocation5 + $0x30] sm:$0xff] %vm2319, %v2302
    %2327 = vst.msk [vmem:[#allocation5 + $0x38] sm:$0xff] %vm2319, %v2302
    %2328 = vst.msk [vmem:[#allocation5 + $0x40] sm:$0xff] %vm2319, %v2304
    %2329 = vst.msk [vmem:[#allocation5 + $0x48] sm:$0xff] %vm2319, %v2304
    %2330 = vst.msk [vmem:[#allocation5 + $0x50] sm:$0xff] %vm2319, %v2306
    %2331 = vst.msk [vmem:[#allocation5 + $0x58] sm:$0xff] %vm2319, %v2306
    %2332 = vst.msk [vmem:[#allocation5 + $0x60] sm:$0xff] %vm2319, %v2308
    %2333 = vst.msk [vmem:[#allocation5 + $0x68] sm:$0xff] %vm2319, %v2308
    %2334 = vst.msk [vmem:[#allocation5 + $0x70] sm:$0xff] %vm2319, %v2310
    %2335 = vst.msk [vmem:[#allocation5 + $0x78] sm:$0xff] %vm2319, %v2310
    %v2336 = vcvt.s32.f32 %v67
    %v2337 = vcvt.s32.f32 %v68
    %v2338 = vadd.f32 %v2336, 1.0
    %v2339 = vadd.f32 %v2337, 1.0
    %v2340 = vlog2.pop %v2338
    %v2341 = vmul.f32 %v2340, 0.6931472
    %v2342 = vlog2.pop %v2339
    %v2343 = vmul.f32 %v2342, 0.6931472
    %vm2344 = vcmask 958368
    %2345 = vst.msk [vmem:[#allocation5] sm:$0xff] %vm2344, %v2341
    %2346 = vst.msk [vmem:[#allocation5 + $0x8] sm:$0xff] %vm2344, %v2343
    %2347 = vst.msk [vmem:[#allocation5 + $0x10] sm:$0xff] %vm2344, %v2341
    %2348 = vst.msk [vmem:[#allocation5 + $0x18] sm:$0xff] %vm2344, %v2343
    %2349 = vst.msk [vmem:[#allocation5 + $0x20] sm:$0xff] %vm2344, %v2341
    %2350 = vst.msk [vmem:[#allocation5 + $0x28] sm:$0xff] %vm2344, %v2343
    %2351 = vst.msk [vmem:[#allocation5 + $0x30] sm:$0xff] %vm2344, %v2341
    %2352 = vst.msk [vmem:[#allocation5 + $0x38] sm:$0xff] %vm2344, %v2343
    %2353 = vst.msk [vmem:[#allocation5 + $0x40] sm:$0xff] %vm2344, %v2341
    %2354 = vst.msk [vmem:[#allocation5 + $0x48] sm:$0xff] %vm2344, %v2343
    %2355 = vst.msk [vmem:[#allocation5 + $0x50] sm:$0xff] %vm2344, %v2341
    %2356 = vst.msk [vmem:[#allocation5 + $0x58] sm:$0xff] %vm2344, %v2343
    %2357 = vst.msk [vmem:[#allocation5 + $0x60] sm:$0xff] %vm2344, %v2341
    %2358 = vst.msk [vmem:[#allocation5 + $0x68] sm:$0xff] %vm2344, %v2343
    %2359 = vst.msk [vmem:[#allocation5 + $0x70] sm:$0xff] %vm2344, %v2341
    %2360 = vst.msk [vmem:[#allocation5 + $0x78] sm:$0xff] %vm2344, %v2343
    %v2361 = vmul.f32 %v2336, 0.001
    %v2362 = vmul.f32 %v2337, 0.001
    %v2363 = vmul.f32 %v2361, 1.442695
    %v2364 = vpow.pop %v2363
    %v2365 = vmul.f32 %v2362, 1.442695
    %v2366 = vpow.pop %v2365
    %v2367 = vsub.f32 %v2364, 1.0
    %v2368 = vsub.f32 %v2366, 1.0
    %vm2369 = vcmask 966568
    %2370 = vst.msk [vmem:[#allocation5] sm:$0xff] %vm2369, %v2367
    %2371 = vst.msk [vmem:[#allocation5 + $0x8] sm:$0xff] %vm2369, %v2368
    %2372 = vst.msk [vmem:[#allocation5 + $0x10] sm:$0xff] %vm2369, %v2367
    %2373 = vst.msk [vmem:[#allocation5 + $0x18] sm:$0xff] %vm2369, %v2368
    %2374 = vst.msk [vmem:[#allocation5 + $0x20] sm:$0xff] %vm2369, %v2367
    %2375 = vst.msk [vmem:[#allocation5 + $0x28] sm:$0xff] %vm2369, %v2368
    %2376 = vst.msk [vmem:[#allocation5 + $0x30] sm:$0xff] %vm2369, %v2367
    %2377 = vst.msk [vmem:[#allocation5 + $0x38] sm:$0xff] %vm2369, %v2368
    %2378 = vst.msk [vmem:[#allocation5 + $0x40] sm:$0xff] %vm2369, %v2367
    %2379 = vst.msk [vmem:[#allocation5 + $0x48] sm:$0xff] %vm2369, %v2368
    %2380 = vst.msk [vmem:[#allocation5 + $0x50] sm:$0xff] %vm2369, %v2367
    %2381 = vst.msk [vmem:[#allocation5 + $0x58] sm:$0xff] %vm2369, %v2368
    %2382 = vst.msk [vmem:[#allocation5 + $0x60] sm:$0xff] %vm2369, %v2367
    %2383 = vst.msk [vmem:[#allocation5 + $0x68] sm:$0xff] %vm2369, %v2368
    %2384 = vst.msk [vmem:[#allocation5 + $0x70] sm:$0xff] %vm2369, %v2367
    %2385 = vst.msk [vmem:[#allocation5 + $0x78] sm:$0xff] %vm2369, %v2368
    %vm2386 = vcmask 1048496
    %2387 = vst.msk [vmem:[#allocation5] sm:$0xff] %vm2386, 0.0
    %2388 = vst.msk [vmem:[#allocation5 + $0x8] sm:$0xff] %vm2386, 0.0
    %2389 = vst.msk [vmem:[#allocation5 + $0x10] sm:$0xff] %vm2386, 0.0
    %2390 = vst.msk [vmem:[#allocation5 + $0x18] sm:$0xff] %vm2386, 0.0
    %2391 = vst.msk [vmem:[#allocation5 + $0x20] sm:$0xff] %vm2386, 0.0
    %2392 = vst.msk [vmem:[#allocation5 + $0x28] sm:$0xff] %vm2386, 0.0
    %2393 = vst.msk [vmem:[#allocation5 + $0x30] sm:$0xff] %vm2386, 0.0
    %2394 = vst.msk [vmem:[#allocation5 + $0x38] sm:$0xff] %vm2386, 0.0
    %2395 = vst.msk [vmem:[#allocation5 + $0x40] sm:$0xff] %vm2386, 0.0
    %2396 = vst.msk [vmem:[#allocation5 + $0x48] sm:$0xff] %vm2386, 0.0
    %2397 = vst.msk [vmem:[#allocation5 + $0x50] sm:$0xff] %vm2386, 0.0
    %2398 = vst.msk [vmem:[#allocation5 + $0x58] sm:$0xff] %vm2386, 0.0
    %2399 = vst.msk [vmem:[#allocation5 + $0x60] sm:$0xff] %vm2386, 0.0
    %2400 = vst.msk [vmem:[#allocation5 + $0x68] sm:$0xff] %vm2386, 0.0
    %2401 = vst.msk [vmem:[#allocation5 + $0x70] sm:$0xff] %vm2386, 0.0
    %2402 = vst.msk [vmem:[#allocation5 + $0x78] sm:$0xff] %vm2386, 0.0
    // Predicated region
    $region38: #{tpu_custom_call.1} parent=1 // pred_check
      _
    $region39: #{tpu_custom_call.1} parent=1 // pred_check_branch
      %2404 = sbr.rel (0) target = $region41
    $region40: #{tpu_custom_call.1} parent=1 // pred_region
      %2406 = vsyncadd [#allocation4], 0
      %s2407 = sshll.u32 [#allocation5], 4
      %s2408 = int_to_ptr.vmem [resolvable:$true] %s2407
      %s2409 = sshll.u32 %s8, 4
      %s2410 = int_to_ptr.hbm [resolvable:$true] %s2409
      %2415 = dma.vmem_to_hbm [thread:$0]  %s2408, 2048, %s2410, [#allocation4], 128, 128, 8
    $region41: #{tpu_custom_call.1} parent=1 // pred_fallthru
      _
    // Predicated region
    $region42: #{tpu_custom_call.1} parent=1 // pred_check
      _
    $region43: #{tpu_custom_call.1} parent=1 // pred_check_branch
      %2417 = sbr.rel (0) target = $region45
    $region44: #{tpu_custom_call.1} parent=1 // pred_region
      %2419 = vsyncadd [#allocation7], 0
      %s2420 = sshll.u32 [#allocation6], 4
      %s2421 = int_to_ptr.vmem [resolvable:$true] %s2420
      %s2422 = sshll.u32 %s9, 4
      %s2423 = int_to_ptr.hbm [resolvable:$true] %s2422
      %2428 = dma.vmem_to_hbm [thread:$0]  %s2421, 2048, %s2423, [#allocation7], 128, 128, 8
    $region45: #{tpu_custom_call.1} parent=1 // pred_fallthru
      _
    // Predicated region
    $region46: #{tpu_custom_call.1} parent=1 // pred_check
      _
    $region47: #{tpu_custom_call.1} parent=1 // pred_check_branch
      %2430 = sbr.rel (0) target = $region49
    $region48: #{tpu_custom_call.1} parent=1 // pred_region
      %2432 = vsyncadd [#allocation7], 0
      %s2433 = sshll.u32 [#allocation8], 4
      %s2434 = int_to_ptr.vmem [resolvable:$true] %s2433
      %s2435 = sshll.u32 %s10, 4
      %s2436 = int_to_ptr.hbm [resolvable:$true] %s2435
      %2441 = dma.vmem_to_hbm [thread:$0]  %s2434, 2048, %s2436, [#allocation7], 128, 128, 8
    $region49: #{tpu_custom_call.1} parent=1 // pred_fallthru
      _
    // Predicated region
    $region50: #{tpu_custom_call.1} parent=1 // pred_check
      _
    $region51: #{tpu_custom_call.1} parent=1 // pred_check_branch
      %2443 = sbr.rel (0) target = $region53
    $region52: #{tpu_custom_call.1} parent=1 // pred_region
      %2445 = dma.done [#allocation4], 2048
    $region53: #{tpu_custom_call.1} parent=1 // pred_fallthru
      _
    // Predicated region
    $region54: #{tpu_custom_call.1} parent=1 // pred_check
      _
    $region55: #{tpu_custom_call.1} parent=1 // pred_check_branch
      %2447 = sbr.rel (0) target = $region57
    $region56: #{tpu_custom_call.1} parent=1 // pred_region
      %2449 = dma.done [#allocation7], 2048
    $region57: #{tpu_custom_call.1} parent=1 // pred_fallthru
      _
    // Predicated region
    $region58: #{tpu_custom_call.1} parent=1 // pred_check
      _
    $region59: #{tpu_custom_call.1} parent=1 // pred_check_branch
      %2451 = sbr.rel (0) target = $region61
    $region60: #{tpu_custom_call.1} parent=1 // pred_region
      %2453 = dma.done [#allocation7], 2048
    $region61: #{tpu_custom_call.1} parent=1 // pred_fallthru
      _
    %2454 = vsyncpa [#allocation3], 1
    %2455 = vsyncpa [#allocation4], 1
    %2456 = vsyncpa [#allocation7], 1

</llo_original>
